<compile_context>
chip_gen: v7x
topology: tpu7x:2x2x1
jax: 0.10.0
libtpu: 0.0.40
codegen_flags: <defaults>
</compile_context>

<pallas_src>
import functools

import jax
import jax.numpy as jnp
from jax import lax
from jax.experimental import pallas as pl
from jax.experimental.pallas import tpu as pltpu

_BIG = 1e30  # poison for padded key columns: logit -> -temperature*_BIG -> exp underflows to 0


def _round_up(x, m):
    return (x + m - 1) // m * m


def _cdiv(a, b):
    return (a + b - 1) // b


def _full_spec(x):
    n = x.ndim
    return pl.BlockSpec(x.shape, lambda *_: (0,) * n)


def _vmem_capacity_bytes():
    try:
        return int(pltpu.get_tpu_info().vmem_capacity_bytes)
    except Exception:
        return 64 * 1024 * 1024  # conservative (v7x per-TensorCore VMEM)


def _query_proj_kernel(q_ref, w1a_ref, w1b_ref, w1c_ref, b1_ref,
                       w2_ref, b2_ref, w3_ref, b3_ref, qaug_ref,
                       *, temperature, n_att):
    x = q_ref[0]                                                   # (T1p, C1) f32
    t = x.shape[0]
    row = lax.broadcasted_iota(jnp.int32, x.shape, 0)
    x_prev = jnp.where(row == 0, 0.0, pltpu.roll(x, shift=1, axis=0))          # x[t-1]
    x_next = jnp.where(row == t - 1, 0.0, pltpu.roll(x, shift=t - 1, axis=0))  # x[t+1]
    # k=3 conv as three accumulated MXU pushes (no lane-axis concatenate).
    h = (jnp.dot(x_prev, w1a_ref[...], preferred_element_type=jnp.float32)
         + jnp.dot(x, w1b_ref[...], preferred_element_type=jnp.float32)
         + jnp.dot(x_next, w1c_ref[...], preferred_element_type=jnp.float32)
         + b1_ref[...])
    h = jnp.maximum(h, 0.0)
    h = jnp.maximum(
        jnp.dot(h, w2_ref[...], preferred_element_type=jnp.float32) + b2_ref[...], 0.0)
    # (T1p, A_aug); lanes >= n_att are exactly zero (zero-padded w3 / b3).
    q_enc = jnp.dot(h, w3_ref[...], preferred_element_type=jnp.float32) + b3_ref[...]
    q_sq = jnp.sum(q_enc * q_enc, axis=1, keepdims=True)           # (T1p, 1)
    lane = lax.broadcasted_iota(jnp.int32, q_enc.shape, 1)
    is_sq = (lane == n_att).astype(jnp.float32)
    is_const = (lane == n_att + 1).astype(jnp.float32)
    qaug_ref[0] = ((2.0 * temperature) * q_enc
                   + is_sq * ((-temperature) * q_sq)
                   + (-temperature) * is_const)


def _key_proj_kernel(k_ref, w1a_ref, w1b_ref, w1c_ref, b1_ref,
                     w2_ref, b2_ref, kaug_ref, *, n_att, t2_valid):
    x = k_ref[0]                                                   # (C2, T2p) f32, channel-major
    t = x.shape[1]
    col = lax.broadcasted_iota(jnp.int32, x.shape, 1)
    x_prev = jnp.where(col == 0, 0.0, pltpu.roll(x, shift=1, axis=1))          # x[:, t-1]
    x_next = jnp.where(col == t - 1, 0.0, pltpu.roll(x, shift=t - 1, axis=1))  # x[:, t+1]
    h = (jnp.dot(w1a_ref[...], x_prev, preferred_element_type=jnp.float32)
         + jnp.dot(w1b_ref[...], x, preferred_element_type=jnp.float32)
         + jnp.dot(w1c_ref[...], x_next, preferred_element_type=jnp.float32)
         + b1_ref[...])
    h = jnp.maximum(h, 0.0)                                        # (2*C2, T2p)
    # (A_aug, T2p); rows >= n_att are exactly zero (zero-padded wk2 / bk2).
    k_enc = jnp.dot(w2_ref[...], h, preferred_element_type=jnp.float32) + b2_ref[...]
    k_sq = jnp.sum(k_enc * k_enc, axis=0, keepdims=True)           # (1, T2p)
    if t2_valid < t:                       # static: poison pad columns ONCE per batch
        cc = lax.broadcasted_iota(jnp.int32, k_sq.shape, 1)
        k_sq = jnp.where(cc < t2_valid, k_sq, jnp.float32(_BIG))
    row = lax.broadcasted_iota(jnp.int32, k_enc.shape, 0)
    is_one = (row == n_att).astype(jnp.float32)
    is_sq = (row == n_att + 1).astype(jnp.float32)
    kaug_ref[0] = k_enc + is_one + is_sq * k_sq                    # k_aug^T, (A_aug, T2p)


def _attn_kernel(qaug_ref, kaugT_ref, attn_ref, logprob_ref):
    # Single MXU contraction yields  -temperature * ||q_i - k_j||^2  directly.
    logits = jnp.dot(qaug_ref[0], kaugT_ref[0], preferred_element_type=jnp.float32)
    logprob_ref[0] = logits.astype(logprob_ref.dtype)              # store straight from the matmul
    m = jnp.max(logits, axis=-1, keepdims=True)
    e = jnp.exp(logits - m)
    s = jnp.sum(e, axis=-1, keepdims=True)
    inv = pl.reciprocal(s, approx=True)                            # EUP slot
    inv = inv * (2.0 - s * inv)                                    # one Newton step -> ~f32 exact
    attn_ref[0] = (e * inv).astype(attn_ref.dtype)


def _pick_tq(t1, t2p, a_aug, batch, vmem_cap):
    budget = int(vmem_cap * 0.85)
    fixed = 4 * 2 * a_aug * t2p                      # double-buffered k_aug^T
    per_row = 4 * (7 * t2p + 2 * a_aug)              # 2 outs x 2 bufs + ~3 temps + q dbl-buf
    tq_fit = max(8, ((budget - fixed) // per_row) // 8 * 8)
    tq_target = 512 if vmem_cap >= 80 * 1024 * 1024 else 256
    tq = max(8, min(tq_target, tq_fit, _round_up(t1, 8)))
    # Megacore: v7x has 2 TensorCores — make sure there are >= 2 grid points when possible.
    while batch * _cdiv(t1, tq) < 2 and tq > 8:
        tq = _round_up(tq // 2, 8)
    return tq


def alignment_encoder_forward(queries, keys, params, temperature=0.0005,
                              out_dtype=jnp.float32):
    """queries: (B, C1, T1) mel; keys: (B, C2, T2) text.
    Returns (attn, attn_logprob), each (B, 1, T1, T2) in out_dtype."""
    # TODO(synk): conditioning / mask / attn_prior branches and dist_type='cosine'
    # are not implemented (forward is exercised with its defaults: None / 'l2').
    B, C1, T1 = queries.shape
    _, C2, T2 = keys.shape
    A = params['wq3'].shape[0]
    temperature = float(temperature)

    a_aug = max(128, _round_up(A + 2, 128))          # lane-dense augmented width
    t2p = _round_up(T2, 128)                         # lane axis of the (T1,T2) outputs

    vmem_cap = max(32 * 1024 * 1024,
                   min(int(_vmem_capacity_bytes() * 0.72), 100 * 1024 * 1024))
    tq = _pick_tq(T1, t2p, a_aug, B, vmem_cap)
    t1p = _round_up(T1, tq)
    n_qt = t1p // tq

    f32 = jnp.float32
    # Queries: time-major (T, C) — becomes the MXU LHS of the attention contraction.
    q_t = jnp.transpose(queries, (0, 2, 1)).astype(f32)
    q_t = jnp.pad(q_t, ((0, 0), (0, t1p - T1), (0, 0)))
    # Keys stay channel-major (C, T): the key kernel emits k_aug^T directly (no transposes).
    k_c = jnp.pad(keys.astype(f32), ((0, 0), (0, 0), (0, t2p - T2)))

    # ---- PyTorch Conv1d weights -> matmul form ----
    # query path (time-major):  h = x_prev@W0 + x@W1 + x_next@W2,  Wk = w[:,:,k].T
    wq1a = params['wq1'][:, :, 0].T.astype(f32)
    wq1b = params['wq1'][:, :, 1].T.astype(f32)
    wq1c = params['wq1'][:, :, 2].T.astype(f32)
    bq1 = params['bq1'][None, :].astype(f32)
    wq2 = params['wq2'][:, :, 0].T.astype(f32)
    bq2 = params['bq2'][None, :].astype(f32)
    wq3 = jnp.zeros((C1, a_aug), f32).at[:, :A].set(params['wq3'][:, :, 0].T.astype(f32))
    bq3 = jnp.zeros((1, a_aug), f32).at[0, :A].set(params['bq3'].astype(f32))
    # key path (channel-major): h = W0@x_prev + W1@x + W2@x_next,  Wk = w[:,:,k]
    wk1a = params['wk1'][:, :, 0].astype(f32)
    wk1b = params['wk1'][:, :, 1].astype(f32)
    wk1c = params['wk1'][:, :, 2].astype(f32)
    bk1 = params['bk1'][:, None].astype(f32)
    wk2 = jnp.zeros((a_aug, 2 * C2), f32).at[:A, :].set(params['wk2'][:, :, 0].astype(f32))
    bk2 = jnp.zeros((a_aug, 1), f32).at[:A, 0].set(params['bk2'].astype(f32))

    proj_params = pltpu.CompilerParams(
        dimension_semantics=("parallel",), vmem_limit_bytes=vmem_cap)
    # TODO(synk): for very long sequences, tile the projection kernels over time (1-frame halo)
    # to bound their VMEM footprint on 64 MiB (v7x) parts.

    # ---- 1) query projection -> q_aug (B, T1p, A_aug) ----
    q_aug = pl.pallas_call(
        functools.partial(_query_proj_kernel, temperature=temperature, n_att=A),
        out_shape=jax.ShapeDtypeStruct((B, t1p, a_aug), f32),
        grid_spec=pltpu.PrefetchScalarGridSpec(
            num_scalar_prefetch=0, grid=(B,),
            in_specs=[pl.BlockSpec((1, t1p, C1), lambda b: (b, 0, 0)),
                      _full_spec(wq1a), _full_spec(wq1b), _full_spec(wq1c),
                      _full_spec(bq1), _full_spec(wq2), _full_spec(bq2),
                      _full_spec(wq3), _full_spec(bq3)],
            out_specs=pl.BlockSpec((1, t1p, a_aug), lambda b: (b, 0, 0))),
        compiler_params=proj_params,
    )(q_t, wq1a, wq1b, wq1c, bq1, wq2, bq2, wq3, bq3)

    # ---- 2) key projection -> k_aug^T (B, A_aug, T2p), computed once per batch ----
    k_aug_t = pl.pallas_call(
        functools.partial(_key_proj_kernel, n_att=A, t2_valid=T2),
        out_shape=jax.ShapeDtypeStruct((B, a_aug, t2p), f32),
        grid_spec=pltpu.PrefetchScalarGridSpec(
            num_scalar_prefetch=0, grid=(B,),
            in_specs=[pl.BlockSpec((1, C2, t2p), lambda b: (b, 0, 0)),
                      _full_spec(wk1a), _full_spec(wk1b), _full_spec(wk1c),
                      _full_spec(bk1), _full_spec(wk2), _full_spec(bk2)],
            out_specs=pl.BlockSpec((1, a_aug, t2p), lambda b: (b, 0, 0))),
        compiler_params=proj_params,
    )(k_c, wk1a, wk1b, wk1c, bk1, wk2, bk2)

    # ---- 3) distance + softmax, tiled over (B, T1/tq), lane-dense (tq, T2p) stores ----
    # TODO(synk): for extremely long key sequences add a T2 tile + online softmax.
    attn_p, logprob_p = pl.pallas_call(
        _attn_kernel,
        out_shape=(jax.ShapeDtypeStruct((B, t1p, t2p), out_dtype),
                   jax.ShapeDtypeStruct((B, t1p, t2p), out_dtype)),
        grid_spec=pltpu.PrefetchScalarGridSpec(
            num_scalar_prefetch=0, grid=(B, n_qt),
            in_specs=[pl.BlockSpec((1, tq, a_aug), lambda b, i: (b, i, 0)),
                      pl.BlockSpec((1, a_aug, t2p), lambda b, i: (b, 0, 0))],
            out_specs=[pl.BlockSpec((1, tq, t2p), lambda b, i: (b, i, 0)),
                       pl.BlockSpec((1, tq, t2p), lambda b, i: (b, i, 0))]),
        compiler_params=pltpu.CompilerParams(
            dimension_semantics=("parallel", "parallel"),
            vmem_limit_bytes=vmem_cap),
    )(q_aug, k_aug_t)

    attn = attn_p[:, None, :T1, :T2]
    attn_logprob = logprob_p[:, None, :T1, :T2]
    return attn, attn_logprob


def reference_forward(queries, keys, params, temperature=0.0005):
    """Pure-JAX reference matching the PyTorch forward (dist_type='l2', no mask/prior)."""
    def conv1d(x, w, b, pad):
        y = lax.conv_general_dilated(x, w, (1,), [(pad, pad)],
                                     dimension_numbers=('NCH', 'OIH', 'NCH'))
        return y + b[None, :, None]

    q = jnp.maximum(conv1d(queries, params['wq1'], params['bq1'], 1), 0.0)
    q = jnp.maximum(conv1d(q, params['wq2'], params['bq2'], 0), 0.0)
    q_enc = conv1d(q, params['wq3'], params['bq3'], 0)            # (B, A, T1)
    k = jnp.maximum(conv1d(keys, params['wk1'], params['bk1'], 1), 0.0)
    k_enc = conv1d(k, params['wk2'], params['bk2'], 0)            # (B, A, T2)

    dist = jnp.sum((q_enc[:, :, :, None] - k_enc[:, :, None, :]) ** 2,
                   axis=1, keepdims=True)                         # (B, 1, T1, T2)
    attn = -temperature * dist
    attn_logprob = attn
    attn_soft = jax.nn.softmax(attn, axis=3)
    return attn_soft, attn_logprob


def make_params(key, n_mel, n_text, n_att):
    ks = jax.random.split(key, 10)

    def init(k, shape, scale=0.1):
        return scale * jax.random.normal(k, shape, dtype=jnp.float32)

    return {
        # query_proj
        'wq1': init(ks[0], (2 * n_mel, n_mel, 3)),
        'bq1': init(ks[1], (2 * n_mel,)),
        'wq2': init(ks[2], (n_mel, 2 * n_mel, 1)),
        'bq2': init(ks[3], (n_mel,)),
        'wq3': init(ks[4], (n_att, n_mel, 1)),
        'bq3': init(ks[5], (n_att,)),
        # key_proj
        'wk1': init(ks[6], (2 * n_text, n_text, 3)),
        'bk1': init(ks[7], (2 * n_text,)),
        'wk2': init(ks[8], (n_att, 2 * n_text, 1)),
        'bk2': init(ks[9], (n_att,)),
    }


if __name__ == "__main__":
    B, T1, T2 = 2, 16, 8
    n_mel, n_text, n_att = 8, 16, 8
    temperature = 0.0005

    key = jax.random.PRNGKey(0)
    k_p, k_q, k_k = jax.random.split(key, 3)
    params = make_params(k_p, n_mel, n_text, n_att)
    queries = jax.random.normal(k_q, (B, n_mel, T1), dtype=jnp.float32)   # B x C1 x T1
    keys = jax.random.normal(k_k, (B, n_text, T2), dtype=jnp.float32)     # B x C2 x T2

    fwd = jax.jit(functools.partial(alignment_encoder_forward, temperature=temperature))
    attn, attn_logprob = fwd(queries, keys, params)
    attn = jax.block_until_ready(attn)
    attn_logprob = jax.block_until_ready(attn_logprob)

    ref_attn, ref_logprob = reference_forward(queries, keys, params, temperature)
    assert attn.shape == (B, 1, T1, T2) and attn_logprob.shape == (B, 1, T1, T2)
    assert jnp.allclose(attn_logprob, ref_logprob, atol=1e-4, rtol=1e-4), \
        float(jnp.max(jnp.abs(attn_logprob - ref_logprob)))
    assert jnp.allclose(attn, ref_attn, atol=1e-4, rtol=1e-4), \
        float(jnp.max(jnp.abs(attn - ref_attn)))

    print("KERNEL_OK")
</pallas_src>

<mosaic_0001>
module attributes {stable_mosaic.version = 11 : i64} {
  func.func @_query_proj_kernel(%arg0: i32, %arg1: memref<1x16x8xf32, #tpu.memory_space<vmem>>, %arg2: memref<8x16xf32, #tpu.memory_space<vmem>>, %arg3: memref<8x16xf32, #tpu.memory_space<vmem>>, %arg4: memref<8x16xf32, #tpu.memory_space<vmem>>, %arg5: memref<1x16xf32, #tpu.memory_space<vmem>>, %arg6: memref<16x8xf32, #tpu.memory_space<vmem>>, %arg7: memref<1x8xf32, #tpu.memory_space<vmem>>, %arg8: memref<8x128xf32, #tpu.memory_space<vmem>>, %arg9: memref<1x128xf32, #tpu.memory_space<vmem>>, %arg10: memref<1x16x128xf32, #tpu.memory_space<vmem>>) attributes {dimension_semantics = [#tpu.dimension_semantics<parallel>], iteration_bounds = array<i64: 2>, scalar_prefetch = 0 : i64, scratch_operands = 0 : i64, tpu.core_type = #tpu.core_type<tc>, window_params = [{transform_indices = @transform_0, window_bounds = array<i64: 1, 16, 8>}, {pipeline_mode = #tpu.pipeline_mode<synchronous>, transform_indices = @transform_1, window_bounds = array<i64: 8, 16>}, {pipeline_mode = #tpu.pipeline_mode<synchronous>, transform_indices = @transform_2, window_bounds = array<i64: 8, 16>}, {pipeline_mode = #tpu.pipeline_mode<synchronous>, transform_indices = @transform_3, window_bounds = array<i64: 8, 16>}, {pipeline_mode = #tpu.pipeline_mode<synchronous>, transform_indices = @transform_4, window_bounds = array<i64: 1, 16>}, {pipeline_mode = #tpu.pipeline_mode<synchronous>, transform_indices = @transform_5, window_bounds = array<i64: 16, 8>}, {pipeline_mode = #tpu.pipeline_mode<synchronous>, transform_indices = @transform_6, window_bounds = array<i64: 1, 8>}, {pipeline_mode = #tpu.pipeline_mode<synchronous>, transform_indices = @transform_7, window_bounds = array<i64: 8, 128>}, {pipeline_mode = #tpu.pipeline_mode<synchronous>, transform_indices = @transform_8, window_bounds = array<i64: 1, 128>}, {transform_indices = @transform_9, window_bounds = array<i64: 1, 16, 128>}]} {
    %c0 = arith.constant 0 : index
    %c0_0 = arith.constant 0 : index
    %c0_1 = arith.constant 0 : index
    %0 = vector.load %arg1[%c0, %c0_0, %c0_1] : memref<1x16x8xf32, #tpu.memory_space<vmem>>, vector<1x16x8xf32>
    %1 = vector.shape_cast %0 : vector<1x16x8xf32> to vector<16x8xf32>
    %2 = tpu.iota {dimensions = array<i32: 0>} : vector<16x8xi32>
    %c0_i32 = arith.constant 0 : i32
    %3 = vector.broadcast %c0_i32 : i32 to vector<16x8xi32>
    %4 = arith.cmpi eq, %2, %3 : vector<16x8xi32>
    %c1_i32 = arith.constant 1 : i32
    %5 = tpu.dynamic_rotate %1 by %c1_i32 dim 0 : vector<16x8xf32>, i32 -> vector<16x8xf32>
    %cst = arith.constant 0.000000e+00 : f32
    %6 = vector.broadcast %cst : f32 to vector<16x8xf32>
    %7 = arith.select %4, %6, %5 : vector<16x8xi1>, vector<16x8xf32>
    %c15_i32 = arith.constant 15 : i32
    %8 = vector.broadcast %c15_i32 : i32 to vector<16x8xi32>
    %9 = arith.cmpi eq, %2, %8 : vector<16x8xi32>
    %c15_i32_2 = arith.constant 15 : i32
    %10 = tpu.dynamic_rotate %1 by %c15_i32_2 dim 0 : vector<16x8xf32>, i32 -> vector<16x8xf32>
    %cst_3 = arith.constant 0.000000e+00 : f32
    %11 = vector.broadcast %cst_3 : f32 to vector<16x8xf32>
    %12 = arith.select %9, %11, %10 : vector<16x8xi1>, vector<16x8xf32>
    %c0_4 = arith.constant 0 : index
    %c0_5 = arith.constant 0 : index
    %13 = vector.load %arg2[%c0_4, %c0_5] : memref<8x16xf32, #tpu.memory_space<vmem>>, vector<8x16xf32>
    %cst_6 = arith.constant dense<0.000000e+00> : vector<16x16xf32>
    %14 = tpu.matmul %7, %13, %cst_6 {dimension_numbers = #tpu.dot_dimension_numbers<[1], [0], [0], [1], [0, 0, 1, 1], [], []>} : vector<16x8xf32>, vector<8x16xf32>, vector<16x16xf32> -> vector<16x16xf32>
    %c0_7 = arith.constant 0 : index
    %c0_8 = arith.constant 0 : index
    %15 = vector.load %arg3[%c0_7, %c0_8] : memref<8x16xf32, #tpu.memory_space<vmem>>, vector<8x16xf32>
    %cst_9 = arith.constant dense<0.000000e+00> : vector<16x16xf32>
    %16 = tpu.matmul %1, %15, %cst_9 {dimension_numbers = #tpu.dot_dimension_numbers<[1], [0], [0], [1], [0, 0, 1, 1], [], []>} : vector<16x8xf32>, vector<8x16xf32>, vector<16x16xf32> -> vector<16x16xf32>
    %17 = arith.addf %14, %16 : vector<16x16xf32>
    %c0_10 = arith.constant 0 : index
    %c0_11 = arith.constant 0 : index
    %18 = vector.load %arg4[%c0_10, %c0_11] : memref<8x16xf32, #tpu.memory_space<vmem>>, vector<8x16xf32>
    %cst_12 = arith.constant dense<0.000000e+00> : vector<16x16xf32>
    %19 = tpu.matmul %12, %18, %cst_12 {dimension_numbers = #tpu.dot_dimension_numbers<[1], [0], [0], [1], [0, 0, 1, 1], [], []>} : vector<16x8xf32>, vector<8x16xf32>, vector<16x16xf32> -> vector<16x16xf32>
    %20 = arith.addf %17, %19 : vector<16x16xf32>
    %c0_13 = arith.constant 0 : index
    %c0_14 = arith.constant 0 : index
    %21 = vector.load %arg5[%c0_13, %c0_14] : memref<1x16xf32, #tpu.memory_space<vmem>>, vector<1x16xf32>
    %22 = vector.broadcast %21 : vector<1x16xf32> to vector<16x16xf32>
    %23 = arith.addf %20, %22 : vector<16x16xf32>
    %cst_15 = arith.constant 0.000000e+00 : f32
    %24 = vector.broadcast %cst_15 : f32 to vector<16x16xf32>
    %25 = arith.maximumf %23, %24 : vector<16x16xf32>
    %c0_16 = arith.constant 0 : index
    %c0_17 = arith.constant 0 : index
    %26 = vector.load %arg6[%c0_16, %c0_17] : memref<16x8xf32, #tpu.memory_space<vmem>>, vector<16x8xf32>
    %cst_18 = arith.constant dense<0.000000e+00> : vector<16x8xf32>
    %27 = tpu.matmul %25, %26, %cst_18 {dimension_numbers = #tpu.dot_dimension_numbers<[1], [0], [0], [1], [0, 0, 1, 1], [], []>} : vector<16x16xf32>, vector<16x8xf32>, vector<16x8xf32> -> vector<16x8xf32>
    %c0_19 = arith.constant 0 : index
    %c0_20 = arith.constant 0 : index
    %28 = vector.load %arg7[%c0_19, %c0_20] : memref<1x8xf32, #tpu.memory_space<vmem>>, vector<1x8xf32>
    %29 = vector.broadcast %28 : vector<1x8xf32> to vector<16x8xf32>
    %30 = arith.addf %27, %29 : vector<16x8xf32>
    %cst_21 = arith.constant 0.000000e+00 : f32
    %31 = vector.broadcast %cst_21 : f32 to vector<16x8xf32>
    %32 = arith.maximumf %30, %31 : vector<16x8xf32>
    %c0_22 = arith.constant 0 : index
    %c0_23 = arith.constant 0 : index
    %33 = vector.load %arg8[%c0_22, %c0_23] : memref<8x128xf32, #tpu.memory_space<vmem>>, vector<8x128xf32>
    %cst_24 = arith.constant dense<0.000000e+00> : vector<16x128xf32>
    %34 = tpu.matmul %32, %33, %cst_24 {dimension_numbers = #tpu.dot_dimension_numbers<[1], [0], [0], [1], [0, 0, 1, 1], [], []>} : vector<16x8xf32>, vector<8x128xf32>, vector<16x128xf32> -> vector<16x128xf32>
    %c0_25 = arith.constant 0 : index
    %c0_26 = arith.constant 0 : index
    %35 = vector.load %arg9[%c0_25, %c0_26] : memref<1x128xf32, #tpu.memory_space<vmem>>, vector<1x128xf32>
    %36 = vector.broadcast %35 : vector<1x128xf32> to vector<16x128xf32>
    %37 = arith.addf %34, %36 : vector<16x128xf32>
    %38 = arith.mulf %37, %37 : vector<16x128xf32>
    %cst_27 = arith.constant dense<0.000000e+00> : vector<16xf32>
    %39 = vector.multi_reduction <add>, %38, %cst_27 [1] : vector<16x128xf32> to vector<16xf32>
    %40 = vector.shape_cast %39 : vector<16xf32> to vector<16x1xf32>
    %41 = tpu.iota {dimensions = array<i32: 1>} : vector<16x128xi32>
    %c8_i32 = arith.constant 8 : i32
    %42 = vector.broadcast %c8_i32 : i32 to vector<16x128xi32>
    %43 = arith.cmpi eq, %41, %42 : vector<16x128xi32>
    %44 = arith.extui %43 : vector<16x128xi1> to vector<16x128xi32>
    %45 = arith.sitofp %44 : vector<16x128xi32> to vector<16x128xf32>
    %c9_i32 = arith.constant 9 : i32
    %46 = vector.broadcast %c9_i32 : i32 to vector<16x128xi32>
    %47 = arith.cmpi eq, %41, %46 : vector<16x128xi32>
    %48 = arith.extui %47 : vector<16x128xi1> to vector<16x128xi32>
    %49 = arith.sitofp %48 : vector<16x128xi32> to vector<16x128xf32>
    %cst_28 = arith.constant 1.000000e-03 : f32
    %50 = vector.broadcast %cst_28 : f32 to vector<16x128xf32>
    %51 = arith.mulf %50, %37 : vector<16x128xf32>
    %cst_29 = arith.constant -5.000000e-04 : f32
    %52 = vector.broadcast %cst_29 : f32 to vector<16x1xf32>
    %53 = arith.mulf %52, %40 : vector<16x1xf32>
    %54 = vector.broadcast %53 : vector<16x1xf32> to vector<16x128xf32>
    %55 = arith.mulf %45, %54 : vector<16x128xf32>
    %56 = arith.addf %51, %55 : vector<16x128xf32>
    %cst_30 = arith.constant -5.000000e-04 : f32
    %57 = vector.broadcast %cst_30 : f32 to vector<16x128xf32>
    %58 = arith.mulf %57, %49 : vector<16x128xf32>
    %59 = arith.addf %56, %58 : vector<16x128xf32>
    %c0_31 = arith.constant 0 : index
    %c0_32 = arith.constant 0 : index
    %c0_33 = arith.constant 0 : index
    %60 = vector.load %arg10[%c0_31, %c0_32, %c0_33] : memref<1x16x128xf32, #tpu.memory_space<vmem>>, vector<1x16x128xf32>
    %61 = vector.shape_cast %60 : vector<1x16x128xf32> to vector<16x128xf32>
    %62 = vector.shape_cast %59 : vector<16x128xf32> to vector<1x16x128xf32>
    tpu.vector_store %arg10[%c0_31, %c0_32, %c0_33], %62 {strides = array<i32>} : memref<1x16x128xf32, #tpu.memory_space<vmem>>, vector<1x16x128xf32>,
    return
  }
  func.func @transform_0(%arg0: i32) -> (i32, i32, i32) {
    %c0_i32 = arith.constant 0 : i32
    %c0_i32_0 = arith.constant 0 : i32
    %c0_i32_1 = arith.constant 0 : i32
    return %arg0, %c0_i32, %c0_i32_0 : i32, i32, i32
  }
  func.func @transform_1(%arg0: i32) -> (i32, i32) {
    %c0_i32 = arith.constant 0 : i32
    %c0_i32_0 = arith.constant 0 : i32
    %c0_i32_1 = arith.constant 0 : i32
    return %c0_i32, %c0_i32_0 : i32, i32
  }
  func.func @transform_2(%arg0: i32) -> (i32, i32) {
    %c0_i32 = arith.constant 0 : i32
    %c0_i32_0 = arith.constant 0 : i32
    %c0_i32_1 = arith.constant 0 : i32
    return %c0_i32, %c0_i32_0 : i32, i32
  }
  func.func @transform_3(%arg0: i32) -> (i32, i32) {
    %c0_i32 = arith.constant 0 : i32
    %c0_i32_0 = arith.constant 0 : i32
    %c0_i32_1 = arith.constant 0 : i32
    return %c0_i32, %c0_i32_0 : i32, i32
  }
  func.func @transform_4(%arg0: i32) -> (i32, i32) {
    %c0_i32 = arith.constant 0 : i32
    %c0_i32_0 = arith.constant 0 : i32
    %c0_i32_1 = arith.constant 0 : i32
    return %c0_i32, %c0_i32_0 : i32, i32
  }
  func.func @transform_5(%arg0: i32) -> (i32, i32) {
    %c0_i32 = arith.constant 0 : i32
    %c0_i32_0 = arith.constant 0 : i32
    %c0_i32_1 = arith.constant 0 : i32
    return %c0_i32, %c0_i32_0 : i32, i32
  }
  func.func @transform_6(%arg0: i32) -> (i32, i32) {
    %c0_i32 = arith.constant 0 : i32
    %c0_i32_0 = arith.constant 0 : i32
    %c0_i32_1 = arith.constant 0 : i32
    return %c0_i32, %c0_i32_0 : i32, i32
  }
  func.func @transform_7(%arg0: i32) -> (i32, i32) {
    %c0_i32 = arith.constant 0 : i32
    %c0_i32_0 = arith.constant 0 : i32
    %c0_i32_1 = arith.constant 0 : i32
    return %c0_i32, %c0_i32_0 : i32, i32
  }
  func.func @transform_8(%arg0: i32) -> (i32, i32) {
    %c0_i32 = arith.constant 0 : i32
    %c0_i32_0 = arith.constant 0 : i32
    %c0_i32_1 = arith.constant 0 : i32
    return %c0_i32, %c0_i32_0 : i32, i32
  }
  func.func @transform_9(%arg0: i32) -> (i32, i32, i32) {
    %c0_i32 = arith.constant 0 : i32
    %c0_i32_0 = arith.constant 0 : i32
    %c0_i32_1 = arith.constant 0 : i32
    return %arg0, %c0_i32, %c0_i32_0 : i32, i32, i32
  }
}

module attributes {stable_mosaic.version = 11 : i64} {
  func.func @_key_proj_kernel(%arg0: i32, %arg1: memref<1x16x128xf32, #tpu.memory_space<vmem>>, %arg2: memref<32x16xf32, #tpu.memory_space<vmem>>, %arg3: memref<32x16xf32, #tpu.memory_space<vmem>>, %arg4: memref<32x16xf32, #tpu.memory_space<vmem>>, %arg5: memref<32x1xf32, #tpu.memory_space<vmem>>, %arg6: memref<128x32xf32, #tpu.memory_space<vmem>>, %arg7: memref<128x1xf32, #tpu.memory_space<vmem>>, %arg8: memref<1x128x128xf32, #tpu.memory_space<vmem>>) attributes {dimension_semantics = [#tpu.dimension_semantics<parallel>], iteration_bounds = array<i64: 2>, scalar_prefetch = 0 : i64, scratch_operands = 0 : i64, tpu.core_type = #tpu.core_type<tc>, window_params = [{transform_indices = @transform_0, window_bounds = array<i64: 1, 16, 128>}, {pipeline_mode = #tpu.pipeline_mode<synchronous>, transform_indices = @transform_1, window_bounds = array<i64: 32, 16>}, {pipeline_mode = #tpu.pipeline_mode<synchronous>, transform_indices = @transform_2, window_bounds = array<i64: 32, 16>}, {pipeline_mode = #tpu.pipeline_mode<synchronous>, transform_indices = @transform_3, window_bounds = array<i64: 32, 16>}, {pipeline_mode = #tpu.pipeline_mode<synchronous>, transform_indices = @transform_4, window_bounds = array<i64: 32, 1>}, {pipeline_mode = #tpu.pipeline_mode<synchronous>, transform_indices = @transform_5, window_bounds = array<i64: 128, 32>}, {pipeline_mode = #tpu.pipeline_mode<synchronous>, transform_indices = @transform_6, window_bounds = array<i64: 128, 1>}, {transform_indices = @transform_7, window_bounds = array<i64: 1, 128, 128>}]} {
    %c0 = arith.constant 0 : index
    %c0_0 = arith.constant 0 : index
    %c0_1 = arith.constant 0 : index
    %0 = vector.load %arg1[%c0, %c0_0, %c0_1] : memref<1x16x128xf32, #tpu.memory_space<vmem>>, vector<1x16x128xf32>
    %1 = vector.shape_cast %0 : vector<1x16x128xf32> to vector<16x128xf32>
    %2 = tpu.iota {dimensions = array<i32: 1>} : vector<16x128xi32>
    %c0_i32 = arith.constant 0 : i32
    %3 = vector.broadcast %c0_i32 : i32 to vector<16x128xi32>
    %4 = arith.cmpi eq, %2, %3 : vector<16x128xi32>
    %c1_i32 = arith.constant 1 : i32
    %5 = tpu.dynamic_rotate %1 by %c1_i32 dim 1 : vector<16x128xf32>, i32 -> vector<16x128xf32>
    %cst = arith.constant 0.000000e+00 : f32
    %6 = vector.broadcast %cst : f32 to vector<16x128xf32>
    %7 = arith.select %4, %6, %5 : vector<16x128xi1>, vector<16x128xf32>
    %c127_i32 = arith.constant 127 : i32
    %8 = vector.broadcast %c127_i32 : i32 to vector<16x128xi32>
    %9 = arith.cmpi eq, %2, %8 : vector<16x128xi32>
    %c127_i32_2 = arith.constant 127 : i32
    %10 = tpu.dynamic_rotate %1 by %c127_i32_2 dim 1 : vector<16x128xf32>, i32 -> vector<16x128xf32>
    %cst_3 = arith.constant 0.000000e+00 : f32
    %11 = vector.broadcast %cst_3 : f32 to vector<16x128xf32>
    %12 = arith.select %9, %11, %10 : vector<16x128xi1>, vector<16x128xf32>
    %c0_4 = arith.constant 0 : index
    %c0_5 = arith.constant 0 : index
    %13 = vector.load %arg2[%c0_4, %c0_5] : memref<32x16xf32, #tpu.memory_space<vmem>>, vector<32x16xf32>
    %cst_6 = arith.constant dense<0.000000e+00> : vector<32x128xf32>
    %14 = tpu.matmul %13, %7, %cst_6 {dimension_numbers = #tpu.dot_dimension_numbers<[1], [0], [0], [1], [0, 0, 1, 1], [], []>} : vector<32x16xf32>, vector<16x128xf32>, vector<32x128xf32> -> vector<32x128xf32>
    %c0_7 = arith.constant 0 : index
    %c0_8 = arith.constant 0 : index
    %15 = vector.load %arg3[%c0_7, %c0_8] : memref<32x16xf32, #tpu.memory_space<vmem>>, vector<32x16xf32>
    %cst_9 = arith.constant dense<0.000000e+00> : vector<32x128xf32>
    %16 = tpu.matmul %15, %1, %cst_9 {dimension_numbers = #tpu.dot_dimension_numbers<[1], [0], [0], [1], [0, 0, 1, 1], [], []>} : vector<32x16xf32>, vector<16x128xf32>, vector<32x128xf32> -> vector<32x128xf32>
    %17 = arith.addf %14, %16 : vector<32x128xf32>
    %c0_10 = arith.constant 0 : index
    %c0_11 = arith.constant 0 : index
    %18 = vector.load %arg4[%c0_10, %c0_11] : memref<32x16xf32, #tpu.memory_space<vmem>>, vector<32x16xf32>
    %cst_12 = arith.constant dense<0.000000e+00> : vector<32x128xf32>
    %19 = tpu.matmul %18, %12, %cst_12 {dimension_numbers = #tpu.dot_dimension_numbers<[1], [0], [0], [1], [0, 0, 1, 1], [], []>} : vector<32x16xf32>, vector<16x128xf32>, vector<32x128xf32> -> vector<32x128xf32>
    %20 = arith.addf %17, %19 : vector<32x128xf32>
    %c0_13 = arith.constant 0 : index
    %c0_14 = arith.constant 0 : index
    %21 = vector.load %arg5[%c0_13, %c0_14] : memref<32x1xf32, #tpu.memory_space<vmem>>, vector<32x1xf32>
    %22 = vector.broadcast %21 : vector<32x1xf32> to vector<32x128xf32>
    %23 = arith.addf %20, %22 : vector<32x128xf32>
    %cst_15 = arith.constant 0.000000e+00 : f32
    %24 = vector.broadcast %cst_15 : f32 to vector<32x128xf32>
    %25 = arith.maximumf %23, %24 : vector<32x128xf32>
    %c0_16 = arith.constant 0 : index
    %c0_17 = arith.constant 0 : index
    %26 = vector.load %arg6[%c0_16, %c0_17] : memref<128x32xf32, #tpu.memory_space<vmem>>, vector<128x32xf32>
    %cst_18 = arith.constant dense<0.000000e+00> : vector<128x128xf32>
    %27 = tpu.matmul %26, %25, %cst_18 {dimension_numbers = #tpu.dot_dimension_numbers<[1], [0], [0], [1], [0, 0, 1, 1], [], []>} : vector<128x32xf32>, vector<32x128xf32>, vector<128x128xf32> -> vector<128x128xf32>
    %c0_19 = arith.constant 0 : index
    %c0_20 = arith.constant 0 : index
    %28 = vector.load %arg7[%c0_19, %c0_20] : memref<128x1xf32, #tpu.memory_space<vmem>>, vector<128x1xf32>
    %29 = vector.broadcast %28 : vector<128x1xf32> to vector<128x128xf32>
    %30 = arith.addf %27, %29 : vector<128x128xf32>
    %31 = arith.mulf %30, %30 : vector<128x128xf32>
    %cst_21 = arith.constant dense<0.000000e+00> : vector<128xf32>
    %32 = vector.multi_reduction <add>, %31, %cst_21 [0] : vector<128x128xf32> to vector<128xf32>
    %33 = vector.shape_cast %32 : vector<128xf32> to vector<1x128xf32>
    %34 = tpu.iota {dimensions = array<i32: 1>} : vector<1x128xi32>
    %c8_i32 = arith.constant 8 : i32
    %35 = vector.broadcast %c8_i32 : i32 to vector<1x128xi32>
    %36 = arith.cmpi slt, %34, %35 : vector<1x128xi32>
    %cst_22 = arith.constant 1.000000e+30 : f32
    %37 = vector.broadcast %cst_22 : f32 to vector<1x128xf32>
    %38 = arith.select %36, %33, %37 : vector<1x128xi1>, vector<1x128xf32>
    %39 = tpu.iota {dimensions = array<i32: 0>} : vector<128x128xi32>
    %c8_i32_23 = arith.constant 8 : i32
    %40 = vector.broadcast %c8_i32_23 : i32 to vector<128x128xi32>
    %41 = arith.cmpi eq, %39, %40 : vector<128x128xi32>
    %42 = arith.extui %41 : vector<128x128xi1> to vector<128x128xi32>
    %43 = arith.sitofp %42 : vector<128x128xi32> to vector<128x128xf32>
    %c9_i32 = arith.constant 9 : i32
    %44 = vector.broadcast %c9_i32 : i32 to vector<128x128xi32>
    %45 = arith.cmpi eq, %39, %44 : vector<128x128xi32>
    %46 = arith.extui %45 : vector<128x128xi1> to vector<128x128xi32>
    %47 = arith.sitofp %46 : vector<128x128xi32> to vector<128x128xf32>
    %48 = arith.addf %30, %43 : vector<128x128xf32>
    %49 = vector.broadcast %38 : vector<1x128xf32> to vector<128x128xf32>
    %50 = arith.mulf %47, %49 : vector<128x128xf32>
    %51 = arith.addf %48, %50 : vector<128x128xf32>
    %c0_24 = arith.constant 0 : index
    %c0_25 = arith.constant 0 : index
    %c0_26 = arith.constant 0 : index
    %52 = vector.load %arg8[%c0_24, %c0_25, %c0_26] : memref<1x128x128xf32, #tpu.memory_space<vmem>>, vector<1x128x128xf32>
    %53 = vector.shape_cast %52 : vector<1x128x128xf32> to vector<128x128xf32>
    %54 = vector.shape_cast %51 : vector<128x128xf32> to vector<1x128x128xf32>
    tpu.vector_store %arg8[%c0_24, %c0_25, %c0_26], %54 {strides = array<i32>} : memref<1x128x128xf32, #tpu.memory_space<vmem>>, vector<1x128x128xf32>,
    return
  }
  func.func @transform_0(%arg0: i32) -> (i32, i32, i32) {
    %c0_i32 = arith.constant 0 : i32
    %c0_i32_0 = arith.constant 0 : i32
    %c0_i32_1 = arith.constant 0 : i32
    return %arg0, %c0_i32, %c0_i32_0 : i32, i32, i32
  }
  func.func @transform_1(%arg0: i32) -> (i32, i32) {
    %c0_i32 = arith.constant 0 : i32
    %c0_i32_0 = arith.constant 0 : i32
    %c0_i32_1 = arith.constant 0 : i32
    return %c0_i32, %c0_i32_0 : i32, i32
  }
  func.func @transform_2(%arg0: i32) -> (i32, i32) {
    %c0_i32 = arith.constant 0 : i32
    %c0_i32_0 = arith.constant 0 : i32
    %c0_i32_1 = arith.constant 0 : i32
    return %c0_i32, %c0_i32_0 : i32, i32
  }
  func.func @transform_3(%arg0: i32) -> (i32, i32) {
    %c0_i32 = arith.constant 0 : i32
    %c0_i32_0 = arith.constant 0 : i32
    %c0_i32_1 = arith.constant 0 : i32
    return %c0_i32, %c0_i32_0 : i32, i32
  }
  func.func @transform_4(%arg0: i32) -> (i32, i32) {
    %c0_i32 = arith.constant 0 : i32
    %c0_i32_0 = arith.constant 0 : i32
    %c0_i32_1 = arith.constant 0 : i32
    return %c0_i32, %c0_i32_0 : i32, i32
  }
  func.func @transform_5(%arg0: i32) -> (i32, i32) {
    %c0_i32 = arith.constant 0 : i32
    %c0_i32_0 = arith.constant 0 : i32
    %c0_i32_1 = arith.constant 0 : i32
    return %c0_i32, %c0_i32_0 : i32, i32
  }
  func.func @transform_6(%arg0: i32) -> (i32, i32) {
    %c0_i32 = arith.constant 0 : i32
    %c0_i32_0 = arith.constant 0 : i32
    %c0_i32_1 = arith.constant 0 : i32
    return %c0_i32, %c0_i32_0 : i32, i32
  }
  func.func @transform_7(%arg0: i32) -> (i32, i32, i32) {
    %c0_i32 = arith.constant 0 : i32
    %c0_i32_0 = arith.constant 0 : i32
    %c0_i32_1 = arith.constant 0 : i32
    return %arg0, %c0_i32, %c0_i32_0 : i32, i32, i32
  }
}

module attributes {stable_mosaic.version = 11 : i64} {
  func.func @_attn_kernel(%arg0: i32, %arg1: i32, %arg2: memref<1x16x128xf32, #tpu.memory_space<vmem>>, %arg3: memref<1x128x128xf32, #tpu.memory_space<vmem>>, %arg4: memref<1x16x128xf32, #tpu.memory_space<vmem>>, %arg5: memref<1x16x128xf32, #tpu.memory_space<vmem>>) attributes {dimension_semantics = [#tpu.dimension_semantics<parallel>, #tpu.dimension_semantics<parallel>], iteration_bounds = array<i64: 2, 1>, scalar_prefetch = 0 : i64, scratch_operands = 0 : i64, tpu.core_type = #tpu.core_type<tc>, window_params = [{transform_indices = @transform_0, window_bounds = array<i64: 1, 16, 128>}, {transform_indices = @transform_1, window_bounds = array<i64: 1, 128, 128>}, {transform_indices = @transform_2, window_bounds = array<i64: 1, 16, 128>}, {transform_indices = @transform_3, window_bounds = array<i64: 1, 16, 128>}]} {
    %c0 = arith.constant 0 : index
    %c0_0 = arith.constant 0 : index
    %c0_1 = arith.constant 0 : index
    %0 = vector.load %arg2[%c0, %c0_0, %c0_1] : memref<1x16x128xf32, #tpu.memory_space<vmem>>, vector<1x16x128xf32>
    %1 = vector.shape_cast %0 : vector<1x16x128xf32> to vector<16x128xf32>
    %c0_2 = arith.constant 0 : index
    %c0_3 = arith.constant 0 : index
    %c0_4 = arith.constant 0 : index
    %2 = vector.load %arg3[%c0_2, %c0_3, %c0_4] : memref<1x128x128xf32, #tpu.memory_space<vmem>>, vector<1x128x128xf32>
    %3 = vector.shape_cast %2 : vector<1x128x128xf32> to vector<128x128xf32>
    %cst = arith.constant dense<0.000000e+00> : vector<16x128xf32>
    %4 = tpu.matmul %1, %3, %cst {dimension_numbers = #tpu.dot_dimension_numbers<[1], [0], [0], [1], [0, 0, 1, 1], [], []>} : vector<16x128xf32>, vector<128x128xf32>, vector<16x128xf32> -> vector<16x128xf32>
    %c0_5 = arith.constant 0 : index
    %c0_6 = arith.constant 0 : index
    %c0_7 = arith.constant 0 : index
    %5 = vector.load %arg5[%c0_5, %c0_6, %c0_7] : memref<1x16x128xf32, #tpu.memory_space<vmem>>, vector<1x16x128xf32>
    %6 = vector.shape_cast %5 : vector<1x16x128xf32> to vector<16x128xf32>
    %7 = vector.shape_cast %4 : vector<16x128xf32> to vector<1x16x128xf32>
    tpu.vector_store %arg5[%c0_5, %c0_6, %c0_7], %7 {strides = array<i32>} : memref<1x16x128xf32, #tpu.memory_space<vmem>>, vector<1x16x128xf32>,
    %cst_8 = arith.constant dense<0xFF800000> : vector<16xf32>
    %8 = vector.multi_reduction <maximumf>, %4, %cst_8 [1] : vector<16x128xf32> to vector<16xf32>
    %9 = vector.shape_cast %8 : vector<16xf32> to vector<16x1xf32>
    %10 = vector.broadcast %9 : vector<16x1xf32> to vector<16x128xf32>
    %11 = arith.subf %4, %10 : vector<16x128xf32>
    %12 = math.exp %11 : vector<16x128xf32>
    %cst_9 = arith.constant dense<0.000000e+00> : vector<16xf32>
    %13 = vector.multi_reduction <add>, %12, %cst_9 [1] : vector<16x128xf32> to vector<16xf32>
    %14 = vector.shape_cast %13 : vector<16xf32> to vector<16x1xf32>
    %15 = tpu.reciprocal %14 {approx = true} : vector<16x1xf32> -> vector<16x1xf32>
    %16 = arith.mulf %14, %15 : vector<16x1xf32>
    %cst_10 = arith.constant 2.000000e+00 : f32
    %17 = vector.broadcast %cst_10 : f32 to vector<16x1xf32>
    %18 = arith.subf %17, %16 : vector<16x1xf32>
    %19 = arith.mulf %15, %18 : vector<16x1xf32>
    %20 = vector.broadcast %19 : vector<16x1xf32> to vector<16x128xf32>
    %21 = arith.mulf %12, %20 : vector<16x128xf32>
    %c0_11 = arith.constant 0 : index
    %c0_12 = arith.constant 0 : index
    %c0_13 = arith.constant 0 : index
    %22 = vector.load %arg4[%c0_11, %c0_12, %c0_13] : memref<1x16x128xf32, #tpu.memory_space<vmem>>, vector<1x16x128xf32>
    %23 = vector.shape_cast %22 : vector<1x16x128xf32> to vector<16x128xf32>
    %24 = vector.shape_cast %21 : vector<16x128xf32> to vector<1x16x128xf32>
    tpu.vector_store %arg4[%c0_11, %c0_12, %c0_13], %24 {strides = array<i32>} : memref<1x16x128xf32, #tpu.memory_space<vmem>>, vector<1x16x128xf32>,
    return
  }
  func.func @transform_0(%arg0: i32, %arg1: i32) -> (i32, i32, i32) {
    %c0_i32 = arith.constant 0 : i32
    %c0_i32_0 = arith.constant 0 : i32
    return %arg0, %arg1, %c0_i32 : i32, i32, i32
  }
  func.func @transform_1(%arg0: i32, %arg1: i32) -> (i32, i32, i32) {
    %c0_i32 = arith.constant 0 : i32
    %c0_i32_0 = arith.constant 0 : i32
    %c0_i32_1 = arith.constant 0 : i32
    return %arg0, %c0_i32, %c0_i32_0 : i32, i32, i32
  }
  func.func @transform_2(%arg0: i32, %arg1: i32) -> (i32, i32, i32) {
    %c0_i32 = arith.constant 0 : i32
    %c0_i32_0 = arith.constant 0 : i32
    return %arg0, %arg1, %c0_i32 : i32, i32, i32
  }
  func.func @transform_3(%arg0: i32, %arg1: i32) -> (i32, i32, i32) {
    %c0_i32 = arith.constant 0 : i32
    %c0_i32_0 = arith.constant 0 : i32
    return %arg0, %arg1, %c0_i32 : i32, i32, i32
  }
}

</mosaic_0001>

<llo_original>
// kernel: alignment_encoder_forward.5
$region0: #{alignment_encoder_forward.5}
  #allocation0 [shape = 'u32[]', space=smem, size = 0x4, offset = 0x4, fixed_abs, tag = 'smem constant byte address 0x4 - core index']
  #allocation1 [shape = 'u32[144,128]{1,0:T(1,128)}', space=vmem, size = 0x12000, scoped, tag = 'internal scratch']
  %s0 = inlined_call_operand.vmem [shape: f32[2,16,128], index: 0, kind: input, shape index: {}]
  %s1 = inlined_call_operand.vmem [shape: f32[2,128,128], index: 1, kind: input, shape index: {}]
  %s2 = inlined_call_operand.vmem [shape: f32[2,16,128], index: 2, kind: output, shape index: {0}]
  %s3 = inlined_call_operand.vmem [shape: f32[2,16,128], index: 3, kind: output, shape index: {1}]
  %4 = xla_tuple %s2, %s3
  %s5 = sld [smem:[#allocation0]]
  $region49: #{alignment_encoder_forward.5} parent=0
    _
  %s7 = ssub.s32 1, %s5
  %s8 = scalar_select 0, %s7, %s5
  loop: start=0, step=1, limit=4
  $region2: #{alignment_encoder_forward.5} parent=0 // loop_pre_header
    _
  $region3: #{alignment_encoder_forward.5} parent=0 // loop_header
    %s10 = sphi 0, %s14
    %p11 = scmp.ge.s32.totalorder %s10, 4
    %s17 = sphi 0, %s29
    %s18 = sphi 0, %s25
    %s19 = sphi 0, %s17
    %s20 = sphi 0, %s18
    %s21 = sphi 0, %s19
    %s22 = sphi 0, %s20
    %s34 = sphi 0, %s36
    %s37 = sphi 0, %s34
    %s38 = sphi 0, %s37
    %s54 = sphi 0, %s38
    %s60 = sphi 0, %s62
    %s63 = sphi 0, %s60
    %s64 = sphi 0, %s63
    %s80 = sphi 0, %s64
    %s88 = sphi 0, %s90
    %s91 = sphi 0, %s88
    %s92 = sphi 0, %s91
    %s108 = sphi 0, %s92
    %s116 = sphi 0, %s118
    %s119 = sphi 0, %s116
    %s120 = sphi 0, %s119
    %s136 = sphi 0, %s120
  $region4: #{alignment_encoder_forward.5} parent=0 // loop_header_branch
    %13 = sbr.rel (%p11) target = $region8
  $region5: #{alignment_encoder_forward.5} parent=0 // loop_body
    %s15 = ssub.s32 %s10, 1
    %s16 = ssub.s32 %s10, 2
    %s23 = sadd.s32 1, %s18
    %p24 = scmp.ge.s32.totalorder %s23, 1
    %s25 = scalar_select %p24, 0, %s23
    %s26 = sadd.s32 1, %s17
    %s27 = scalar_select %p24, %s26, %s17
    %p28 = scmp.ge.s32.totalorder %s27, 2
    %s29 = scalar_select %p28, 0, %s27
    %s30 = ssub.s32 %s17, %s29
    %s31 = ssub.s32 %s18, %s25
    %s32 = sor.u32 %s30, %s31
    %p33 = scmp.eq.s32.totalorder %s32, 0
    %s35 = sadd.s32 %s34, 1
    %s36 = scalar_select %p33, %s34, %s35
    %p39 = pneg %p33
    %p40 = scmp.eq.s32.totalorder %s10, 1
    %p41 = por %p39, %p40
    %p42 = scmp.ne.s32.totalorder %s34, %s37
    %p43 = scmp.eq.s32.totalorder %s10, 0
    %p44 = por %p42, %p43
    %p45 = scmp.ne.s32.totalorder %s34, %s37
    %p46 = scmp.eq.s32.totalorder %s15, 1
    %p47 = por %p45, %p46
    %p48 = scmp.ne.s32.totalorder %s37, %s38
    %p49 = scmp.eq.s32.totalorder %s15, 0
    %p50 = por %p48, %p49
    %p51 = scmp.ne.s32.totalorder %s37, %s38
    %p52 = scmp.eq.s32.totalorder %s16, 1
    %p53 = por %p51, %p52
    %p55 = scmp.ne.s32.totalorder %s38, %s54
    %p56 = scmp.eq.s32.totalorder %s16, 0
    %p57 = por %p55, %p56
    %s58 = ssub.s32 %s17, %s29
    %p59 = scmp.eq.s32.totalorder %s58, 0
    %s61 = sadd.s32 %s60, 1
    %s62 = scalar_select %p59, %s60, %s61
    %p65 = pneg %p59
    %p66 = scmp.eq.s32.totalorder %s10, 1
    %p67 = por %p65, %p66
    %p68 = scmp.ne.s32.totalorder %s60, %s63
    %p69 = scmp.eq.s32.totalorder %s10, 0
    %p70 = por %p68, %p69
    %p71 = scmp.ne.s32.totalorder %s60, %s63
    %p72 = scmp.eq.s32.totalorder %s15, 1
    %p73 = por %p71, %p72
    %p74 = scmp.ne.s32.totalorder %s63, %s64
    %p75 = scmp.eq.s32.totalorder %s15, 0
    %p76 = por %p74, %p75
    %p77 = scmp.ne.s32.totalorder %s63, %s64
    %p78 = scmp.eq.s32.totalorder %s16, 1
    %p79 = por %p77, %p78
    %p81 = scmp.ne.s32.totalorder %s64, %s80
    %p82 = scmp.eq.s32.totalorder %s16, 0
    %p83 = por %p81, %p82
    %s84 = ssub.s32 %s17, %s29
    %s85 = ssub.s32 %s18, %s25
    %s86 = sor.u32 %s84, %s85
    %p87 = scmp.eq.s32.totalorder %s86, 0
    %s89 = sadd.s32 %s88, 1
    %s90 = scalar_select %p87, %s88, %s89
    %p93 = pneg %p87
    %p94 = scmp.eq.s32.totalorder %s10, 1
    %p95 = por %p93, %p94
    %p96 = scmp.ne.s32.totalorder %s88, %s91
    %p97 = scmp.eq.s32.totalorder %s10, 0
    %p98 = por %p96, %p97
    %p99 = scmp.ne.s32.totalorder %s88, %s91
    %p100 = scmp.eq.s32.totalorder %s15, 1
    %p101 = por %p99, %p100
    %p102 = scmp.ne.s32.totalorder %s91, %s92
    %p103 = scmp.eq.s32.totalorder %s15, 0
    %p104 = por %p102, %p103
    %p105 = scmp.ne.s32.totalorder %s91, %s92
    %p106 = scmp.eq.s32.totalorder %s16, 1
    %p107 = por %p105, %p106
    %p109 = scmp.ne.s32.totalorder %s92, %s108
    %p110 = scmp.eq.s32.totalorder %s16, 0
    %p111 = por %p109, %p110
    %s112 = ssub.s32 %s17, %s29
    %s113 = ssub.s32 %s18, %s25
    %s114 = sor.u32 %s112, %s113
    %p115 = scmp.eq.s32.totalorder %s114, 0
    %s117 = sadd.s32 %s116, 1
    %s118 = scalar_select %p115, %s116, %s117
    %p121 = pneg %p115
    %p122 = scmp.eq.s32.totalorder %s10, 1
    %p123 = por %p121, %p122
    %p124 = scmp.ne.s32.totalorder %s116, %s119
    %p125 = scmp.eq.s32.totalorder %s10, 0
    %p126 = por %p124, %p125
    %p127 = scmp.ne.s32.totalorder %s116, %s119
    %p128 = scmp.eq.s32.totalorder %s15, 1
    %p129 = por %p127, %p128
    %p130 = scmp.ne.s32.totalorder %s119, %s120
    %p131 = scmp.eq.s32.totalorder %s15, 0
    %p132 = por %p130, %p131
    %p133 = scmp.ne.s32.totalorder %s119, %s120
    %p134 = scmp.eq.s32.totalorder %s16, 1
    %p135 = por %p133, %p134
    %p137 = scmp.ne.s32.totalorder %s120, %s136
    %p138 = scmp.eq.s32.totalorder %s16, 0
    %p139 = por %p137, %p138
    %p140 = scmp.le.s32.totalorder 1, %s10
    %p141 = scmp.lt.s32.totalorder %s10, 3
    %p142 = pnand %p140, %p141
    %p143 = pneg %p142
    // Predicated region
    $region9: #{alignment_encoder_forward.5} parent=5 // pred_check
      _
    $region10: #{alignment_encoder_forward.5} parent=5 // pred_check_branch
      %145 = sbr.rel (%p142) target = $region12
    $region11: #{alignment_encoder_forward.5} parent=5 // pred_region
      %s146 = ssub.s32 %s10, 1
    $region12: #{alignment_encoder_forward.5} parent=5 // pred_fallthru
      _
    %p147 = scmp.lt.s32.totalorder %s10, 2
    // Predicated region
    $region13: #{alignment_encoder_forward.5} parent=5 // pred_check
      %p148 = pneg %p147
    $region14: #{alignment_encoder_forward.5} parent=5 // pred_check_branch
      %150 = sbr.rel (%p148) target = $region16
    $region15: #{alignment_encoder_forward.5} parent=5 // pred_region
      // Predicated region
      $region17: #{alignment_encoder_forward.5} parent=15 // pred_check
        %p151 = pneg %p44
      $region18: #{alignment_encoder_forward.5} parent=15 // pred_check_branch
        %153 = sbr.rel (%p151) target = $region20
      $region19: #{alignment_encoder_forward.5} parent=15 // pred_region
        %s154 = smul.u32 2, %s18
        %p155 = scmp.lt.s32.totalorder %s17, 1
        %s156 = scalar_select %p155, %s17, 1
        %p157 = scmp.lt.s32.totalorder %s154, 1
        %s158 = scalar_select %p157, %s154, 1
        %s159 = smul.addr %s156, 2
        %s160 = sadd.s32 %s158, %s159
        %s161 = smul.addr %s160, 8
        %s162 = scalar_lea.vmem %s0, %s161
        %s163 = smul.u32 2, %s18
      $region20: #{alignment_encoder_forward.5} parent=15 // pred_fallthru
        _
      // Predicated region
      $region21: #{alignment_encoder_forward.5} parent=15 // pred_check
        %p164 = pneg %p70
      $region22: #{alignment_encoder_forward.5} parent=15 // pred_check_branch
        %166 = sbr.rel (%p164) target = $region24
      $region23: #{alignment_encoder_forward.5} parent=15 // pred_region
        %p167 = scmp.lt.s32.totalorder %s17, 1
        %s168 = scalar_select %p167, %s17, 1
        %s169 = smul.addr %s168, 16
        %s170 = smul.addr %s169, 8
        %s171 = scalar_lea.vmem %s1, %s170
      $region24: #{alignment_encoder_forward.5} parent=15 // pred_fallthru
        _
    $region16: #{alignment_encoder_forward.5} parent=5 // pred_fallthru
      _
    %p172 = scmp.le.s32.totalorder 1, %s10
    %p173 = scmp.lt.s32.totalorder %s10, 3
    %p174 = pnand %p172, %p173
    %p175 = pneg %p174
    // Predicated region
    $region25: #{alignment_encoder_forward.5} parent=5 // pred_check
      _
    $region26: #{alignment_encoder_forward.5} parent=5 // pred_check_branch
      %177 = sbr.rel (%p174) target = $region28
    $region27: #{alignment_encoder_forward.5} parent=5 // pred_region
      %s178 = ssub.s32 %s10, 1
      %s179 = smul.u32 2, %s20
      %p180 = scmp.lt.s32.totalorder %s19, 1
      %s181 = scalar_select %p180, %s19, 1
      %p182 = scmp.lt.s32.totalorder %s179, 1
      %s183 = scalar_select %p182, %s179, 1
      %s184 = smul.addr %s181, 2
      %s185 = sadd.s32 %s183, %s184
      %s186 = smul.addr %s185, 8
      %s187 = scalar_lea.vmem %s0, %s186
      %p188 = pneg %p50
      %p189 = pneg %p47
      %p190 = scmp.lt.s32.totalorder %s19, 1
      %s191 = scalar_select %p190, %s19, 1
      %s192 = smul.addr %s191, 16
      %s193 = smul.addr %s192, 8
      %s194 = scalar_lea.vmem %s1, %s193
      %p195 = pneg %p76
      %p196 = pneg %p73
      %p197 = pneg %p104
      %p198 = pneg %p101
      %s199 = smul.u32 2, %s20
      %p200 = scmp.lt.s32.totalorder %s19, 1
      %s201 = scalar_select %p200, %s19, 1
      %p202 = scmp.lt.s32.totalorder %s199, 1
      %s203 = scalar_select %p202, %s199, 1
      %s204 = smul.addr %s201, 2
      %s205 = sadd.s32 %s203, %s204
      %s206 = smul.addr %s205, 8
      %s207 = scalar_lea.vmem %s2, %s206
      %p208 = pneg %p132
      %p209 = pneg %p129
      %s210 = smul.u32 2, %s20
      %p211 = scmp.lt.s32.totalorder %s19, 1
      %s212 = scalar_select %p211, %s19, 1
      %p213 = scmp.lt.s32.totalorder %s210, 1
      %s214 = scalar_select %p213, %s210, 1
      %s215 = smul.addr %s212, 2
      %s216 = sadd.s32 %s214, %s215
      %s217 = smul.addr %s216, 8
      %s218 = scalar_lea.vmem %s3, %s217
      %s219 = smul.u32 2, %s20
      %p220 = scmp.lt.s32.totalorder %s19, 1
      %s221 = scalar_select %p220, %s19, 1
      %p222 = scmp.lt.s32.totalorder %s219, 1
      %s223 = scalar_select %p222, %s219, 1
      %s224 = smul.addr %s221, 2
      %s225 = sadd.s32 %s223, %s224
      %s226 = smul.addr %s225, 8
      %s227 = scalar_lea.vmem %s0, %s226
      %s228 = smul.u32 2, %s20
      %p229 = scmp.lt.s32.totalorder %s19, 1
      %s230 = scalar_select %p229, %s19, 1
      %s231 = smul.addr %s230, 16
      %s232 = smul.addr %s231, 8
      %s233 = scalar_lea.vmem %s1, %s232
      %s234 = smul.u32 2, %s20
      %p235 = scmp.lt.s32.totalorder %s19, 1
      %s236 = scalar_select %p235, %s19, 1
      %p237 = scmp.lt.s32.totalorder %s234, 1
      %s238 = scalar_select %p237, %s234, 1
      %s239 = smul.addr %s236, 2
      %s240 = sadd.s32 %s238, %s239
      %s241 = smul.addr %s240, 8
      %s242 = scalar_lea.vmem %s2, %s241
      %s243 = smul.u32 2, %s20
      %s244 = smul.u32 2, %s20
      %p245 = scmp.lt.s32.totalorder %s19, 1
      %s246 = scalar_select %p245, %s19, 1
      %p247 = scmp.lt.s32.totalorder %s244, 1
      %s248 = scalar_select %p247, %s244, 1
      %s249 = smul.addr %s246, 2
      %s250 = sadd.s32 %s248, %s249
      %s251 = smul.addr %s250, 8
      %s252 = scalar_lea.vmem %s3, %s251
      %s253 = smul.u32 2, %s20
      %v254 = vld [vmem:[%s227] sm:$0xff]
      %v255 = vld [vmem:[%s227 + $0x8] sm:$0xff]
      %v256 = vld [vmem:[%s233] sm:$0xff]
      %v257 = vld [vmem:[%s233 + $0x8] sm:$0xff]
      %v258 = vld [vmem:[%s233 + $0x10] sm:$0xff]
      %v259 = vld [vmem:[%s233 + $0x18] sm:$0xff]
      %v260 = vld [vmem:[%s233 + $0x20] sm:$0xff]
      %v261 = vld [vmem:[%s233 + $0x28] sm:$0xff]
      %v262 = vld [vmem:[%s233 + $0x30] sm:$0xff]
      %v263 = vld [vmem:[%s233 + $0x38] sm:$0xff]
      %v264 = vld [vmem:[%s233 + $0x40] sm:$0xff]
      %v265 = vld [vmem:[%s233 + $0x48] sm:$0xff]
      %v266 = vld [vmem:[%s233 + $0x50] sm:$0xff]
      %v267 = vld [vmem:[%s233 + $0x58] sm:$0xff]
      %v268 = vld [vmem:[%s233 + $0x60] sm:$0xff]
      %v269 = vld [vmem:[%s233 + $0x68] sm:$0xff]
      %v270 = vld [vmem:[%s233 + $0x70] sm:$0xff]
      %v271 = vld [vmem:[%s233 + $0x78] sm:$0xff]
      %272 = vmatprep.subr.mxu0 0.0
      %273 = vmatpush1.msra.mxu0 %v256
      %274 = vmatprep.subr.mxu0 0.0
      %275 = vmatpush1.msra.mxu0 %v257
      %276 = vmatprep.subr.mxu0 0.0
      %277 = vmatpush1.msra.mxu0 %v258
      %278 = vmatprep.subr.mxu0 0.0
      %279 = vmatpush1.msra.mxu0 %v259
      %280 = vmatprep.subr.mxu0 0.0
      %281 = vmatpush1.msra.mxu0 %v260
      %282 = vmatprep.subr.mxu0 0.0
      %283 = vmatpush1.msra.mxu0 %v261
      %284 = vmatprep.subr.mxu0 0.0
      %285 = vmatpush1.msra.mxu0 %v262
      %286 = vmatprep.subr.mxu0 0.0
      %287 = vmatpush1.msra.mxu0 %v263
      %288 = vmatprep.subr.mxu0 0.0
      %289 = vmatpush1.msra.mxu0 %v264
      %290 = vmatprep.subr.mxu0 0.0
      %291 = vmatpush1.msra.mxu0 %v265
      %292 = vmatprep.subr.mxu0 0.0
      %293 = vmatpush1.msra.mxu0 %v266
      %294 = vmatprep.subr.mxu0 0.0
      %295 = vmatpush1.msra.mxu0 %v267
      %296 = vmatprep.subr.mxu0 0.0
      %297 = vmatpush1.msra.mxu0 %v268
      %298 = vmatprep.subr.mxu0 0.0
      %299 = vmatpush1.msra.mxu0 %v269
      %300 = vmatprep.subr.mxu0 0.0
      %301 = vmatpush1.msra.mxu0 %v270
      %302 = vmatprep.subr.mxu0 0.0
      %303 = vmatpush1.msra.mxu0 %v271
      %304 = vmatprep.subr.mxu0 0.0
      %305 = vmatpush1.msra.mxu0 0.0
      %306 = vmatprep.subr.mxu0 0.0
      %307 = vmatpush1.msra.mxu0 0.0
      %308 = vmatprep.subr.mxu0 0.0
      %309 = vmatpush1.msra.mxu0 0.0
      %310 = vmatprep.subr.mxu0 0.0
      %311 = vmatpush1.msra.mxu0 0.0
      %312 = vmatprep.subr.mxu0 0.0
      %313 = vmatpush1.msra.mxu0 0.0
      %314 = vmatprep.subr.mxu0 0.0
      %315 = vmatpush1.msra.mxu0 0.0
      %316 = vmatprep.subr.mxu0 0.0
      %317 = vmatpush1.msra.mxu0 0.0
      %318 = vmatprep.subr.mxu0 0.0
      %319 = vmatpush1.msra.mxu0 0.0
      %320 = vmatprep.subr.mxu0 0.0
      %321 = vmatpush1.msra.mxu0 0.0
      %322 = vmatprep.subr.mxu0 0.0
      %323 = vmatpush1.msra.mxu0 0.0
      %324 = vmatprep.subr.mxu0 0.0
      %325 = vmatpush1.msra.mxu0 0.0
      %326 = vmatprep.subr.mxu0 0.0
      %327 = vmatpush1.msra.mxu0 0.0
      %328 = vmatprep.subr.mxu0 0.0
      %329 = vmatpush1.msra.mxu0 0.0
      %330 = vmatprep.subr.mxu0 0.0
      %331 = vmatpush1.msra.mxu0 0.0
      %332 = vmatprep.subr.mxu0 0.0
      %333 = vmatpush1.msra.mxu0 0.0
      %334 = vmatprep.subr.mxu0 0.0
      %335 = vmatpush1.msra.mxu0 0.0
      %336 = vmatprep.mubr.f32.mxu0 0.0
      %337 = vmatmul.mubr.f32.gmra.mrb[0].mxu0 %v254
      %v338 = vpop.f32.mrb[0].mxu0
      %v339 = vadd.f32 0.0, %v338
      %v340 = vpop.f32.mrb[0].mxu0
      %341 = vmatprep.mubr.f32.mxu0 0.0
      %342 = vmatmul.mubr.f32.gmra.mrb[0].mxu0 %v255
      %v343 = vpop.f32.mrb[0].mxu0
      %v344 = vadd.f32 0.0, %v343
      %v345 = vpop.f32.mrb[0].mxu0
      %346 = vdwg.mxu0
      %347 = vst [vmem:[%s252] sm:$0xff] %v339
      %348 = vst [vmem:[%s252 + $0x8] sm:$0xff] %v344
      %349 = vmax.xlane.f32.xlu0 %v339
      %v350 = vpop.xlane.xlu0 %349
      %351 = vmax.xlane.f32.xlu0 %v344
      %v352 = vpop.xlane.xlu0 %351
      %v353 = vsub.f32 %v339, %v350
      %v354 = vsub.f32 %v344, %v352
      %v355 = vmul.f32 %v353, 1.442695
      %v356 = vpow.pop %v355
      %v357 = vmul.f32 %v354, 1.442695
      %v358 = vpow.pop %v357
      %359 = vadd.xlane.f32.xlu0 %v356
      %v360 = vpop.xlane.xlu0 %359
      %361 = vadd.xlane.f32.xlu0 %v358
      %v362 = vpop.xlane.xlu0 %361
      %v363 = vrcp.pop %v360
      %v364 = vrcp.pop %v362
      %v365 = vmul.f32 %v360, %v363
      %v366 = vmul.f32 %v362, %v364
      %v367 = vsub.f32 2.0, %v365
      %v368 = vsub.f32 2.0, %v366
      %v369 = vmul.f32 %v363, %v367
      %v370 = vmul.f32 %v364, %v368
      %v371 = vmul.f32 %v356, %v369
      %v372 = vmul.f32 %v358, %v370
      %373 = vst [vmem:[%s242] sm:$0xff] %v371
      %374 = vst [vmem:[%s242 + $0x8] sm:$0xff] %v372
      %s375 = smul.u32 2, %s20
      %p376 = scmp.lt.s32.totalorder %s19, 1
      %s377 = scalar_select %p376, %s19, 1
      %p378 = scmp.lt.s32.totalorder %s375, 1
      %s379 = scalar_select %p378, %s375, 1
      %s380 = smul.addr %s377, 2
      %s381 = sadd.s32 %s379, %s380
      %s382 = smul.addr %s381, 8
      %s383 = scalar_lea.vmem %s2, %s382
      %s384 = smul.u32 2, %s20
      %p385 = scmp.lt.s32.totalorder %s19, 1
      %s386 = scalar_select %p385, %s19, 1
      %p387 = scmp.lt.s32.totalorder %s384, 1
      %s388 = scalar_select %p387, %s384, 1
      %s389 = smul.addr %s386, 2
      %s390 = sadd.s32 %s388, %s389
      %s391 = smul.addr %s390, 8
      %s392 = scalar_lea.vmem %s3, %s391
      // Predicated region
      $region29: #{alignment_encoder_forward.5} parent=27 // pred_check
        %p393 = pneg %p101
      $region30: #{alignment_encoder_forward.5} parent=27 // pred_check_branch
        %395 = sbr.rel (%p393) target = $region32
      $region31: #{alignment_encoder_forward.5} parent=27 // pred_region
        %s396 = smul.u32 2, %s20
      $region32: #{alignment_encoder_forward.5} parent=27 // pred_fallthru
        _
      // Predicated region
      $region33: #{alignment_encoder_forward.5} parent=27 // pred_check
        %p397 = pneg %p129
      $region34: #{alignment_encoder_forward.5} parent=27 // pred_check_branch
        %399 = sbr.rel (%p397) target = $region36
      $region35: #{alignment_encoder_forward.5} parent=27 // pred_region
        %s400 = smul.u32 2, %s20
      $region36: #{alignment_encoder_forward.5} parent=27 // pred_fallthru
        _
    $region28: #{alignment_encoder_forward.5} parent=5 // pred_fallthru
      _
    %p401 = scmp.le.s32.totalorder 2, %s10
    // Predicated region
    $region37: #{alignment_encoder_forward.5} parent=5 // pred_check
      %p402 = pneg %p401
    $region38: #{alignment_encoder_forward.5} parent=5 // pred_check_branch
      %404 = sbr.rel (%p402) target = $region40
    $region39: #{alignment_encoder_forward.5} parent=5 // pred_region
      %s405 = ssub.s32 %s10, 2
      // Predicated region
      $region41: #{alignment_encoder_forward.5} parent=39 // pred_check
        %p406 = pneg %p107
      $region42: #{alignment_encoder_forward.5} parent=39 // pred_check_branch
        %408 = sbr.rel (%p406) target = $region44
      $region43: #{alignment_encoder_forward.5} parent=39 // pred_region
        %s409 = smul.u32 2, %s22
        %p410 = scmp.lt.s32.totalorder %s21, 1
        %s411 = scalar_select %p410, %s21, 1
        %p412 = scmp.lt.s32.totalorder %s409, 1
        %s413 = scalar_select %p412, %s409, 1
        %s414 = smul.addr %s411, 2
        %s415 = sadd.s32 %s413, %s414
        %s416 = smul.addr %s415, 8
        %s417 = scalar_lea.vmem %s2, %s416
      $region44: #{alignment_encoder_forward.5} parent=39 // pred_fallthru
        _
      // Predicated region
      $region45: #{alignment_encoder_forward.5} parent=39 // pred_check
        %p418 = pneg %p135
      $region46: #{alignment_encoder_forward.5} parent=39 // pred_check_branch
        %420 = sbr.rel (%p418) target = $region48
      $region47: #{alignment_encoder_forward.5} parent=39 // pred_region
        %s421 = smul.u32 2, %s22
        %p422 = scmp.lt.s32.totalorder %s21, 1
        %s423 = scalar_select %p422, %s21, 1
        %p424 = scmp.lt.s32.totalorder %s421, 1
        %s425 = scalar_select %p424, %s421, 1
        %s426 = smul.addr %s423, 2
        %s427 = sadd.s32 %s425, %s426
        %s428 = smul.addr %s427, 8
        %s429 = scalar_lea.vmem %s3, %s428
      $region48: #{alignment_encoder_forward.5} parent=39 // pred_fallthru
        _
    $region40: #{alignment_encoder_forward.5} parent=5 // pred_fallthru
      _
  $region6: #{alignment_encoder_forward.5} parent=0 // loop_footer
    %s14 = sadd.s32 1, %s10
  $region7: #{alignment_encoder_forward.5} parent=0 // loop_footer_branch
    %9 = sbr.rel target = $region3
  $region8: #{alignment_encoder_forward.5} parent=0 // loop_exit
    _

// kernel: alignment_encoder_forward.3
$region0: #{alignment_encoder_forward.3}
  #allocation0 [shape = 'u32[]', space=smem, size = 0x4, offset = 0x4, fixed_abs, tag = 'smem constant byte address 0x4 - core index']
  #allocation1 [shape = 'u32[144,128]{1,0:T(1,128)}', space=vmem, size = 0x12000, scoped, tag = 'internal scratch']
  %s0 = inlined_call_operand.vmem [shape: f32[2,16,8], index: 0, kind: input, shape index: {}]
  %s1 = inlined_call_operand.vmem [shape: f32[8,16], index: 1, kind: input, shape index: {}]
  %s2 = inlined_call_operand.vmem [shape: f32[8,16], index: 2, kind: input, shape index: {}]
  %s3 = inlined_call_operand.vmem [shape: f32[8,16], index: 3, kind: input, shape index: {}]
  %s4 = inlined_call_operand.vmem [shape: f32[1,16], index: 4, kind: input, shape index: {}]
  %s5 = inlined_call_operand.vmem [shape: f32[16,8], index: 5, kind: input, shape index: {}]
  %s6 = inlined_call_operand.vmem [shape: f32[1,8], index: 6, kind: input, shape index: {}]
  %s7 = inlined_call_operand.vmem [shape: f32[8,128], index: 7, kind: input, shape index: {}]
  %s8 = inlined_call_operand.vmem [shape: f32[1,128], index: 8, kind: input, shape index: {}]
  %s9 = inlined_call_operand.vmem [shape: f32[2,16,128], index: 9, kind: output, shape index: {}]
  %s10 = sld [smem:[#allocation0]]
  $region69: #{alignment_encoder_forward.3} parent=0
    _
  %s12 = ssub.s32 1, %s10
  %s13 = scalar_select 0, %s12, %s10
  loop: start=0, step=1, limit=4
  $region2: #{alignment_encoder_forward.3} parent=0 // loop_pre_header
    _
  $region3: #{alignment_encoder_forward.3} parent=0 // loop_header
    %s15 = sphi 0, %s19
    %p16 = scmp.ge.s32.totalorder %s15, 4
    %s25 = sphi 0, %s27
    %s28 = sphi 0, %s25
    %s29 = sphi 0, %s28
    %s45 = sphi 0, %s29
    %s49 = sphi 0, %s49
    %s51 = sphi 0, %s49
    %s52 = sphi 0, %s51
    %s66 = sphi 0, %s52
    %s70 = sphi 0, %s70
    %s72 = sphi 0, %s70
    %s73 = sphi 0, %s72
    %s87 = sphi 0, %s73
    %s91 = sphi 0, %s91
    %s93 = sphi 0, %s91
    %s94 = sphi 0, %s93
    %s108 = sphi 0, %s94
    %s112 = sphi 0, %s112
    %s114 = sphi 0, %s112
    %s115 = sphi 0, %s114
    %s129 = sphi 0, %s115
    %s133 = sphi 0, %s133
    %s135 = sphi 0, %s133
    %s136 = sphi 0, %s135
    %s150 = sphi 0, %s136
    %s154 = sphi 0, %s154
    %s156 = sphi 0, %s154
    %s157 = sphi 0, %s156
    %s171 = sphi 0, %s157
    %s175 = sphi 0, %s175
    %s177 = sphi 0, %s175
    %s178 = sphi 0, %s177
    %s192 = sphi 0, %s178
    %s196 = sphi 0, %s196
    %s198 = sphi 0, %s196
    %s199 = sphi 0, %s198
    %s213 = sphi 0, %s199
    %s219 = sphi 0, %s221
    %s222 = sphi 0, %s219
    %s223 = sphi 0, %s222
    %s239 = sphi 0, %s223
  $region4: #{alignment_encoder_forward.3} parent=0 // loop_header_branch
    %18 = sbr.rel (%p16) target = $region8
  $region5: #{alignment_encoder_forward.3} parent=0 // loop_body
    %s20 = ssub.s32 %s15, 1
    %s21 = ssub.s32 %s15, 2
    %s22 = sadd.s32 %s15, 1
    %s23 = ssub.s32 %s15, %s22
    %p24 = scmp.eq.s32.totalorder %s23, 0
    %s26 = sadd.s32 %s25, 1
    %s27 = scalar_select %p24, %s25, %s26
    %p30 = pneg %p24
    %p31 = scmp.eq.s32.totalorder %s15, 1
    %p32 = por %p30, %p31
    %p33 = scmp.ne.s32.totalorder %s25, %s28
    %p34 = scmp.eq.s32.totalorder %s15, 0
    %p35 = por %p33, %p34
    %p36 = scmp.ne.s32.totalorder %s25, %s28
    %p37 = scmp.eq.s32.totalorder %s20, 1
    %p38 = por %p36, %p37
    %p39 = scmp.ne.s32.totalorder %s28, %s29
    %p40 = scmp.eq.s32.totalorder %s20, 0
    %p41 = por %p39, %p40
    %p42 = scmp.ne.s32.totalorder %s28, %s29
    %p43 = scmp.eq.s32.totalorder %s21, 1
    %p44 = por %p42, %p43
    %p46 = scmp.ne.s32.totalorder %s29, %s45
    %p47 = scmp.eq.s32.totalorder %s21, 0
    %p48 = por %p46, %p47
    %s50 = sadd.s32 %s49, 1
    %p53 = scmp.eq.s32.totalorder %s15, 1
    %p54 = scmp.ne.s32.totalorder %s49, %s51
    %p55 = scmp.eq.s32.totalorder %s15, 0
    %p56 = por %p54, %p55
    %p57 = scmp.ne.s32.totalorder %s49, %s51
    %p58 = scmp.eq.s32.totalorder %s20, 1
    %p59 = por %p57, %p58
    %p60 = scmp.ne.s32.totalorder %s51, %s52
    %p61 = scmp.eq.s32.totalorder %s20, 0
    %p62 = por %p60, %p61
    %p63 = scmp.ne.s32.totalorder %s51, %s52
    %p64 = scmp.eq.s32.totalorder %s21, 1
    %p65 = por %p63, %p64
    %p67 = scmp.ne.s32.totalorder %s52, %s66
    %p68 = scmp.eq.s32.totalorder %s21, 0
    %p69 = por %p67, %p68
    %s71 = sadd.s32 %s70, 1
    %p74 = scmp.eq.s32.totalorder %s15, 1
    %p75 = scmp.ne.s32.totalorder %s70, %s72
    %p76 = scmp.eq.s32.totalorder %s15, 0
    %p77 = por %p75, %p76
    %p78 = scmp.ne.s32.totalorder %s70, %s72
    %p79 = scmp.eq.s32.totalorder %s20, 1
    %p80 = por %p78, %p79
    %p81 = scmp.ne.s32.totalorder %s72, %s73
    %p82 = scmp.eq.s32.totalorder %s20, 0
    %p83 = por %p81, %p82
    %p84 = scmp.ne.s32.totalorder %s72, %s73
    %p85 = scmp.eq.s32.totalorder %s21, 1
    %p86 = por %p84, %p85
    %p88 = scmp.ne.s32.totalorder %s73, %s87
    %p89 = scmp.eq.s32.totalorder %s21, 0
    %p90 = por %p88, %p89
    %s92 = sadd.s32 %s91, 1
    %p95 = scmp.eq.s32.totalorder %s15, 1
    %p96 = scmp.ne.s32.totalorder %s91, %s93
    %p97 = scmp.eq.s32.totalorder %s15, 0
    %p98 = por %p96, %p97
    %p99 = scmp.ne.s32.totalorder %s91, %s93
    %p100 = scmp.eq.s32.totalorder %s20, 1
    %p101 = por %p99, %p100
    %p102 = scmp.ne.s32.totalorder %s93, %s94
    %p103 = scmp.eq.s32.totalorder %s20, 0
    %p104 = por %p102, %p103
    %p105 = scmp.ne.s32.totalorder %s93, %s94
    %p106 = scmp.eq.s32.totalorder %s21, 1
    %p107 = por %p105, %p106
    %p109 = scmp.ne.s32.totalorder %s94, %s108
    %p110 = scmp.eq.s32.totalorder %s21, 0
    %p111 = por %p109, %p110
    %s113 = sadd.s32 %s112, 1
    %p116 = scmp.eq.s32.totalorder %s15, 1
    %p117 = scmp.ne.s32.totalorder %s112, %s114
    %p118 = scmp.eq.s32.totalorder %s15, 0
    %p119 = por %p117, %p118
    %p120 = scmp.ne.s32.totalorder %s112, %s114
    %p121 = scmp.eq.s32.totalorder %s20, 1
    %p122 = por %p120, %p121
    %p123 = scmp.ne.s32.totalorder %s114, %s115
    %p124 = scmp.eq.s32.totalorder %s20, 0
    %p125 = por %p123, %p124
    %p126 = scmp.ne.s32.totalorder %s114, %s115
    %p127 = scmp.eq.s32.totalorder %s21, 1
    %p128 = por %p126, %p127
    %p130 = scmp.ne.s32.totalorder %s115, %s129
    %p131 = scmp.eq.s32.totalorder %s21, 0
    %p132 = por %p130, %p131
    %s134 = sadd.s32 %s133, 1
    %p137 = scmp.eq.s32.totalorder %s15, 1
    %p138 = scmp.ne.s32.totalorder %s133, %s135
    %p139 = scmp.eq.s32.totalorder %s15, 0
    %p140 = por %p138, %p139
    %p141 = scmp.ne.s32.totalorder %s133, %s135
    %p142 = scmp.eq.s32.totalorder %s20, 1
    %p143 = por %p141, %p142
    %p144 = scmp.ne.s32.totalorder %s135, %s136
    %p145 = scmp.eq.s32.totalorder %s20, 0
    %p146 = por %p144, %p145
    %p147 = scmp.ne.s32.totalorder %s135, %s136
    %p148 = scmp.eq.s32.totalorder %s21, 1
    %p149 = por %p147, %p148
    %p151 = scmp.ne.s32.totalorder %s136, %s150
    %p152 = scmp.eq.s32.totalorder %s21, 0
    %p153 = por %p151, %p152
    %s155 = sadd.s32 %s154, 1
    %p158 = scmp.eq.s32.totalorder %s15, 1
    %p159 = scmp.ne.s32.totalorder %s154, %s156
    %p160 = scmp.eq.s32.totalorder %s15, 0
    %p161 = por %p159, %p160
    %p162 = scmp.ne.s32.totalorder %s154, %s156
    %p163 = scmp.eq.s32.totalorder %s20, 1
    %p164 = por %p162, %p163
    %p165 = scmp.ne.s32.totalorder %s156, %s157
    %p166 = scmp.eq.s32.totalorder %s20, 0
    %p167 = por %p165, %p166
    %p168 = scmp.ne.s32.totalorder %s156, %s157
    %p169 = scmp.eq.s32.totalorder %s21, 1
    %p170 = por %p168, %p169
    %p172 = scmp.ne.s32.totalorder %s157, %s171
    %p173 = scmp.eq.s32.totalorder %s21, 0
    %p174 = por %p172, %p173
    %s176 = sadd.s32 %s175, 1
    %p179 = scmp.eq.s32.totalorder %s15, 1
    %p180 = scmp.ne.s32.totalorder %s175, %s177
    %p181 = scmp.eq.s32.totalorder %s15, 0
    %p182 = por %p180, %p181
    %p183 = scmp.ne.s32.totalorder %s175, %s177
    %p184 = scmp.eq.s32.totalorder %s20, 1
    %p185 = por %p183, %p184
    %p186 = scmp.ne.s32.totalorder %s177, %s178
    %p187 = scmp.eq.s32.totalorder %s20, 0
    %p188 = por %p186, %p187
    %p189 = scmp.ne.s32.totalorder %s177, %s178
    %p190 = scmp.eq.s32.totalorder %s21, 1
    %p191 = por %p189, %p190
    %p193 = scmp.ne.s32.totalorder %s178, %s192
    %p194 = scmp.eq.s32.totalorder %s21, 0
    %p195 = por %p193, %p194
    %s197 = sadd.s32 %s196, 1
    %p200 = scmp.eq.s32.totalorder %s15, 1
    %p201 = scmp.ne.s32.totalorder %s196, %s198
    %p202 = scmp.eq.s32.totalorder %s15, 0
    %p203 = por %p201, %p202
    %p204 = scmp.ne.s32.totalorder %s196, %s198
    %p205 = scmp.eq.s32.totalorder %s20, 1
    %p206 = por %p204, %p205
    %p207 = scmp.ne.s32.totalorder %s198, %s199
    %p208 = scmp.eq.s32.totalorder %s20, 0
    %p209 = por %p207, %p208
    %p210 = scmp.ne.s32.totalorder %s198, %s199
    %p211 = scmp.eq.s32.totalorder %s21, 1
    %p212 = por %p210, %p211
    %p214 = scmp.ne.s32.totalorder %s199, %s213
    %p215 = scmp.eq.s32.totalorder %s21, 0
    %p216 = por %p214, %p215
    %s217 = ssub.s32 %s15, %s22
    %p218 = scmp.eq.s32.totalorder %s217, 0
    %s220 = sadd.s32 %s219, 1
    %s221 = scalar_select %p218, %s219, %s220
    %p224 = pneg %p218
    %p225 = scmp.eq.s32.totalorder %s15, 1
    %p226 = por %p224, %p225
    %p227 = scmp.ne.s32.totalorder %s219, %s222
    %p228 = scmp.eq.s32.totalorder %s15, 0
    %p229 = por %p227, %p228
    %p230 = scmp.ne.s32.totalorder %s219, %s222
    %p231 = scmp.eq.s32.totalorder %s20, 1
    %p232 = por %p230, %p231
    %p233 = scmp.ne.s32.totalorder %s222, %s223
    %p234 = scmp.eq.s32.totalorder %s20, 0
    %p235 = por %p233, %p234
    %p236 = scmp.ne.s32.totalorder %s222, %s223
    %p237 = scmp.eq.s32.totalorder %s21, 1
    %p238 = por %p236, %p237
    %p240 = scmp.ne.s32.totalorder %s223, %s239
    %p241 = scmp.eq.s32.totalorder %s21, 0
    %p242 = por %p240, %p241
    %p243 = scmp.le.s32.totalorder 1, %s15
    %p244 = scmp.lt.s32.totalorder %s15, 3
    %p245 = pnand %p243, %p244
    %p246 = pneg %p245
    // Predicated region
    $region9: #{alignment_encoder_forward.3} parent=5 // pred_check
      _
    $region10: #{alignment_encoder_forward.3} parent=5 // pred_check_branch
      %248 = sbr.rel (%p245) target = $region12
    $region11: #{alignment_encoder_forward.3} parent=5 // pred_region
      %s249 = ssub.s32 %s15, 1
      // Predicated region
      $region13: #{alignment_encoder_forward.3} parent=11 // pred_check
        %p250 = pneg %p62
      $region14: #{alignment_encoder_forward.3} parent=11 // pred_check_branch
        %252 = sbr.rel (%p250) target = $region16
      $region15: #{alignment_encoder_forward.3} parent=11 // pred_region
        _
      $region16: #{alignment_encoder_forward.3} parent=11 // pred_fallthru
        _
      // Predicated region
      $region17: #{alignment_encoder_forward.3} parent=11 // pred_check
        %p253 = pneg %p83
      $region18: #{alignment_encoder_forward.3} parent=11 // pred_check_branch
        %255 = sbr.rel (%p253) target = $region20
      $region19: #{alignment_encoder_forward.3} parent=11 // pred_region
        _
      $region20: #{alignment_encoder_forward.3} parent=11 // pred_fallthru
        _
      // Predicated region
      $region21: #{alignment_encoder_forward.3} parent=11 // pred_check
        %p256 = pneg %p104
      $region22: #{alignment_encoder_forward.3} parent=11 // pred_check_branch
        %258 = sbr.rel (%p256) target = $region24
      $region23: #{alignment_encoder_forward.3} parent=11 // pred_region
        _
      $region24: #{alignment_encoder_forward.3} parent=11 // pred_fallthru
        _
      // Predicated region
      $region25: #{alignment_encoder_forward.3} parent=11 // pred_check
        %p259 = pneg %p125
      $region26: #{alignment_encoder_forward.3} parent=11 // pred_check_branch
        %261 = sbr.rel (%p259) target = $region28
      $region27: #{alignment_encoder_forward.3} parent=11 // pred_region
        _
      $region28: #{alignment_encoder_forward.3} parent=11 // pred_fallthru
        _
      // Predicated region
      $region29: #{alignment_encoder_forward.3} parent=11 // pred_check
        %p262 = pneg %p146
      $region30: #{alignment_encoder_forward.3} parent=11 // pred_check_branch
        %264 = sbr.rel (%p262) target = $region32
      $region31: #{alignment_encoder_forward.3} parent=11 // pred_region
        _
      $region32: #{alignment_encoder_forward.3} parent=11 // pred_fallthru
        _
      // Predicated region
      $region33: #{alignment_encoder_forward.3} parent=11 // pred_check
        %p265 = pneg %p167
      $region34: #{alignment_encoder_forward.3} parent=11 // pred_check_branch
        %267 = sbr.rel (%p265) target = $region36
      $region35: #{alignment_encoder_forward.3} parent=11 // pred_region
        _
      $region36: #{alignment_encoder_forward.3} parent=11 // pred_fallthru
        _
      // Predicated region
      $region37: #{alignment_encoder_forward.3} parent=11 // pred_check
        %p268 = pneg %p188
      $region38: #{alignment_encoder_forward.3} parent=11 // pred_check_branch
        %270 = sbr.rel (%p268) target = $region40
      $region39: #{alignment_encoder_forward.3} parent=11 // pred_region
        _
      $region40: #{alignment_encoder_forward.3} parent=11 // pred_fallthru
        _
      // Predicated region
      $region41: #{alignment_encoder_forward.3} parent=11 // pred_check
        %p271 = pneg %p209
      $region42: #{alignment_encoder_forward.3} parent=11 // pred_check_branch
        %273 = sbr.rel (%p271) target = $region44
      $region43: #{alignment_encoder_forward.3} parent=11 // pred_region
        _
      $region44: #{alignment_encoder_forward.3} parent=11 // pred_fallthru
        _
    $region12: #{alignment_encoder_forward.3} parent=5 // pred_fallthru
      _
    %p274 = scmp.lt.s32.totalorder %s15, 2
    // Predicated region
    $region45: #{alignment_encoder_forward.3} parent=5 // pred_check
      %p275 = pneg %p274
    $region46: #{alignment_encoder_forward.3} parent=5 // pred_check_branch
      %277 = sbr.rel (%p275) target = $region48
    $region47: #{alignment_encoder_forward.3} parent=5 // pred_region
      // Predicated region
      $region49: #{alignment_encoder_forward.3} parent=47 // pred_check
        %p278 = pneg %p35
      $region50: #{alignment_encoder_forward.3} parent=47 // pred_check_branch
        %280 = sbr.rel (%p278) target = $region52
      $region51: #{alignment_encoder_forward.3} parent=47 // pred_region
        %p281 = scmp.lt.s32.totalorder %s15, 1
        %s282 = scalar_select %p281, %s15, 1
        %s283 = smul.addr %s282, 2
        %s284 = smul.addr %s283, 8
        %s285 = scalar_lea.vmem %s0, %s284
      $region52: #{alignment_encoder_forward.3} parent=47 // pred_fallthru
        _
    $region48: #{alignment_encoder_forward.3} parent=5 // pred_fallthru
      _
    %p286 = scmp.le.s32.totalorder 1, %s15
    %p287 = scmp.lt.s32.totalorder %s15, 3
    %p288 = pnand %p286, %p287
    %p289 = pneg %p288
    // Predicated region
    $region53: #{alignment_encoder_forward.3} parent=5 // pred_check
      _
    $region54: #{alignment_encoder_forward.3} parent=5 // pred_check_branch
      %291 = sbr.rel (%p288) target = $region56
    $region55: #{alignment_encoder_forward.3} parent=5 // pred_region
      %s292 = ssub.s32 %s15, 1
      %p293 = scmp.lt.s32.totalorder %s20, 1
      %s294 = scalar_select %p293, %s20, 1
      %s295 = smul.addr %s294, 2
      %s296 = smul.addr %s295, 8
      %s297 = scalar_lea.vmem %s0, %s296
      %p298 = pneg %p41
      %p299 = pneg %p38
      %p300 = pneg %p62
      %p301 = pneg %p59
      %p302 = pneg %p83
      %p303 = pneg %p80
      %p304 = pneg %p104
      %p305 = pneg %p101
      %p306 = pneg %p125
      %p307 = pneg %p122
      %p308 = pneg %p146
      %p309 = pneg %p143
      %p310 = pneg %p167
      %p311 = pneg %p164
      %p312 = pneg %p188
      %p313 = pneg %p185
      %p314 = pneg %p209
      %p315 = pneg %p206
      %p316 = pneg %p235
      %p317 = pneg %p232
      %p318 = scmp.lt.s32.totalorder %s20, 1
      %s319 = scalar_select %p318, %s20, 1
      %s320 = smul.addr %s319, 2
      %s321 = smul.addr %s320, 8
      %s322 = scalar_lea.vmem %s9, %s321
      %p323 = scmp.lt.s32.totalorder %s20, 1
      %s324 = scalar_select %p323, %s20, 1
      %s325 = smul.addr %s324, 2
      %s326 = smul.addr %s325, 8
      %s327 = scalar_lea.vmem %s0, %s326
      %p328 = scmp.lt.s32.totalorder %s20, 1
      %s329 = scalar_select %p328, %s20, 1
      %s330 = smul.addr %s329, 2
      %s331 = smul.addr %s330, 8
      %s332 = scalar_lea.vmem %s9, %s331
      %v333 = vld [vmem:[%s327] sm:$0xff]
      %v334 = vld [vmem:[%s327 + $0x8] sm:$0xff]
      %v335 = vlaneseq
      %v336 = vshrl.u32 %v335, 7
      %v337 = vadd.s32 %v336, 8
      %vm338 = vcmp.eq.s32.totalorder %v336, 0
      %vm339 = vcmp.eq.s32.totalorder %v337, 0
      %v340 = vrot.slane %v333, 7
      %v341 = vrot.slane %v334, 7
      %vm342 = vcmp.lt.s32.totalorder %v336, 1
      %v343 = vsel %vm342, %v340, %v341
      %v344 = vsel %vm342, %v341, %v340
      %v345 = vsel %vm338, 0.0, %v344
      %v346 = vsel %vm339, 0.0, %v343
      %vm347 = vcmp.eq.s32.totalorder %v336, 15
      %vm348 = vcmp.eq.s32.totalorder %v337, 15
      %v349 = vrot.slane %v333, 1
      %v350 = vrot.slane %v334, 1
      %vm351 = vcmp.lt.s32.totalorder %v336, 7
      %v352 = vsel %vm351, %v349, %v350
      %v353 = vsel %vm351, %v350, %v349
      %v354 = vsel %vm347, 0.0, %v352
      %v355 = vsel %vm348, 0.0, %v353
      %v356 = vld [vmem:[%s1] sm:$0xff]
      %v357 = vld [vmem:[%s2] sm:$0xff]
      %vm358 = vcmask 64512
      %v360 = vsel %vm358, %v333, 0
      %v363 = vsel %vm358, %v334, 0
      %365 = vmatprep.subr.mxu0 0.0
      %366 = vmatpush1.msra.mxu0 %v357
      %367 = vmatprep.subr.mxu0 0.0
      %368 = vmatpush1.msra.mxu0 0.0
      %369 = vmatprep.subr.mxu0 0.0
      %370 = vmatpush1.msra.mxu0 0.0
      %371 = vmatprep.subr.mxu0 0.0
      %372 = vmatpush1.msra.mxu0 0.0
      %373 = vmatprep.subr.mxu0 0.0
      %374 = vmatpush1.msra.mxu0 0.0
      %375 = vmatprep.subr.mxu0 0.0
      %376 = vmatpush1.msra.mxu0 0.0
      %377 = vmatprep.subr.mxu0 0.0
      %378 = vmatpush1.msra.mxu0 0.0
      %379 = vmatprep.subr.mxu0 0.0
      %380 = vmatpush1.msra.mxu0 0.0
      %381 = vmatprep.subr.mxu0 0.0
      %382 = vmatpush1.msra.mxu0 0.0
      %383 = vmatprep.subr.mxu0 0.0
      %384 = vmatpush1.msra.mxu0 0.0
      %385 = vmatprep.subr.mxu0 0.0
      %386 = vmatpush1.msra.mxu0 0.0
      %387 = vmatprep.subr.mxu0 0.0
      %388 = vmatpush1.msra.mxu0 0.0
      %389 = vmatprep.subr.mxu0 0.0
      %390 = vmatpush1.msra.mxu0 0.0
      %391 = vmatprep.subr.mxu0 0.0
      %392 = vmatpush1.msra.mxu0 0.0
      %393 = vmatprep.subr.mxu0 0.0
      %394 = vmatpush1.msra.mxu0 0.0
      %395 = vmatprep.subr.mxu0 0.0
      %396 = vmatpush1.msra.mxu0 0.0
      %397 = vmatprep.subr.mxu0 0.0
      %398 = vmatpush1.msra.mxu0 0.0
      %399 = vmatprep.subr.mxu0 0.0
      %400 = vmatpush1.msra.mxu0 0.0
      %401 = vmatprep.subr.mxu0 0.0
      %402 = vmatpush1.msra.mxu0 0.0
      %403 = vmatprep.subr.mxu0 0.0
      %404 = vmatpush1.msra.mxu0 0.0
      %405 = vmatprep.subr.mxu0 0.0
      %406 = vmatpush1.msra.mxu0 0.0
      %407 = vmatprep.subr.mxu0 0.0
      %408 = vmatpush1.msra.mxu0 0.0
      %409 = vmatprep.subr.mxu0 0.0
      %410 = vmatpush1.msra.mxu0 0.0
      %411 = vmatprep.subr.mxu0 0.0
      %412 = vmatpush1.msra.mxu0 0.0
      %413 = vmatprep.subr.mxu0 0.0
      %414 = vmatpush1.msra.mxu0 0.0
      %415 = vmatprep.subr.mxu0 0.0
      %416 = vmatpush1.msra.mxu0 0.0
      %417 = vmatprep.subr.mxu0 0.0
      %418 = vmatpush1.msra.mxu0 0.0
      %419 = vmatprep.subr.mxu0 0.0
      %420 = vmatpush1.msra.mxu0 0.0
      %421 = vmatprep.subr.mxu0 0.0
      %422 = vmatpush1.msra.mxu0 0.0
      %423 = vmatprep.subr.mxu0 0.0
      %424 = vmatpush1.msra.mxu0 0.0
      %425 = vmatprep.subr.mxu0 0.0
      %426 = vmatpush1.msra.mxu0 0.0
      %427 = vmatprep.subr.mxu0 0.0
      %428 = vmatpush1.msra.mxu0 0.0
      %429 = vmatprep.mubr.f32.mxu0 0.0
      %430 = vmatmul.mubr.f32.gmra.mrb[0].mxu0 %v360
      %v431 = vpop.f32.mrb[0].mxu0
      %v432 = vadd.f32 0.0, %v431
      %v433 = vpop.f32.mrb[0].mxu0
      %434 = vmatprep.mubr.f32.mxu0 0.0
      %435 = vmatmul.mubr.f32.gmra.mrb[0].mxu0 %v363
      %v436 = vpop.f32.mrb[0].mxu0
      %v437 = vadd.f32 0.0, %v436
      %v438 = vpop.f32.mrb[0].mxu0
      %439 = vdwg.mxu0
      %v441 = vsel %vm358, %v345, 0
      %v444 = vsel %vm358, %v346, 0
      %446 = vmatprep.subr.mxu0 0.0
      %447 = vmatpush1.msra.mxu0 %v356
      %448 = vmatprep.subr.mxu0 0.0
      %449 = vmatpush1.msra.mxu0 0.0
      %450 = vmatprep.subr.mxu0 0.0
      %451 = vmatpush1.msra.mxu0 0.0
      %452 = vmatprep.subr.mxu0 0.0
      %453 = vmatpush1.msra.mxu0 0.0
      %454 = vmatprep.subr.mxu0 0.0
      %455 = vmatpush1.msra.mxu0 0.0
      %456 = vmatprep.subr.mxu0 0.0
      %457 = vmatpush1.msra.mxu0 0.0
      %458 = vmatprep.subr.mxu0 0.0
      %459 = vmatpush1.msra.mxu0 0.0
      %460 = vmatprep.subr.mxu0 0.0
      %461 = vmatpush1.msra.mxu0 0.0
      %462 = vmatprep.subr.mxu0 0.0
      %463 = vmatpush1.msra.mxu0 0.0
      %464 = vmatprep.subr.mxu0 0.0
      %465 = vmatpush1.msra.mxu0 0.0
      %466 = vmatprep.subr.mxu0 0.0
      %467 = vmatpush1.msra.mxu0 0.0
      %468 = vmatprep.subr.mxu0 0.0
      %469 = vmatpush1.msra.mxu0 0.0
      %470 = vmatprep.subr.mxu0 0.0
      %471 = vmatpush1.msra.mxu0 0.0
      %472 = vmatprep.subr.mxu0 0.0
      %473 = vmatpush1.msra.mxu0 0.0
      %474 = vmatprep.subr.mxu0 0.0
      %475 = vmatpush1.msra.mxu0 0.0
      %476 = vmatprep.subr.mxu0 0.0
      %477 = vmatpush1.msra.mxu0 0.0
      %478 = vmatprep.subr.mxu0 0.0
      %479 = vmatpush1.msra.mxu0 0.0
      %480 = vmatprep.subr.mxu0 0.0
      %481 = vmatpush1.msra.mxu0 0.0
      %482 = vmatprep.subr.mxu0 0.0
      %483 = vmatpush1.msra.mxu0 0.0
      %484 = vmatprep.subr.mxu0 0.0
      %485 = vmatpush1.msra.mxu0 0.0
      %486 = vmatprep.subr.mxu0 0.0
      %487 = vmatpush1.msra.mxu0 0.0
      %488 = vmatprep.subr.mxu0 0.0
      %489 = vmatpush1.msra.mxu0 0.0
      %490 = vmatprep.subr.mxu0 0.0
      %491 = vmatpush1.msra.mxu0 0.0
      %492 = vmatprep.subr.mxu0 0.0
      %493 = vmatpush1.msra.mxu0 0.0
      %494 = vmatprep.subr.mxu0 0.0
      %495 = vmatpush1.msra.mxu0 0.0
      %496 = vmatprep.subr.mxu0 0.0
      %497 = vmatpush1.msra.mxu0 0.0
      %498 = vmatprep.subr.mxu0 0.0
      %499 = vmatpush1.msra.mxu0 0.0
      %500 = vmatprep.subr.mxu0 0.0
      %501 = vmatpush1.msra.mxu0 0.0
      %502 = vmatprep.subr.mxu0 0.0
      %503 = vmatpush1.msra.mxu0 0.0
      %504 = vmatprep.subr.mxu0 0.0
      %505 = vmatpush1.msra.mxu0 0.0
      %506 = vmatprep.subr.mxu0 0.0
      %507 = vmatpush1.msra.mxu0 0.0
      %508 = vmatprep.subr.mxu0 0.0
      %509 = vmatpush1.msra.mxu0 0.0
      %510 = vmatprep.mubr.f32.mxu0 0.0
      %511 = vmatmul.mubr.f32.gmra.mrb[0].mxu0 %v441
      %v512 = vpop.f32.mrb[0].mxu0
      %v513 = vadd.f32 %v432, %v512
      %v514 = vpop.f32.mrb[0].mxu0
      %515 = vmatprep.mubr.f32.mxu0 0.0
      %516 = vmatmul.mubr.f32.gmra.mrb[0].mxu0 %v444
      %v517 = vpop.f32.mrb[0].mxu0
      %v518 = vadd.f32 %v437, %v517
      %v519 = vpop.f32.mrb[0].mxu0
      %520 = vdwg.mxu0
      %v521 = vld [vmem:[%s3] sm:$0xff]
      %v523 = vsel %vm358, %v354, 0
      %v526 = vsel %vm358, %v355, 0
      %528 = vmatprep.subr.mxu0 0.0
      %529 = vmatpush1.msra.mxu0 %v521
      %530 = vmatprep.subr.mxu0 0.0
      %531 = vmatpush1.msra.mxu0 0.0
      %532 = vmatprep.subr.mxu0 0.0
      %533 = vmatpush1.msra.mxu0 0.0
      %534 = vmatprep.subr.mxu0 0.0
      %535 = vmatpush1.msra.mxu0 0.0
      %536 = vmatprep.subr.mxu0 0.0
      %537 = vmatpush1.msra.mxu0 0.0
      %538 = vmatprep.subr.mxu0 0.0
      %539 = vmatpush1.msra.mxu0 0.0
      %540 = vmatprep.subr.mxu0 0.0
      %541 = vmatpush1.msra.mxu0 0.0
      %542 = vmatprep.subr.mxu0 0.0
      %543 = vmatpush1.msra.mxu0 0.0
      %544 = vmatprep.subr.mxu0 0.0
      %545 = vmatpush1.msra.mxu0 0.0
      %546 = vmatprep.subr.mxu0 0.0
      %547 = vmatpush1.msra.mxu0 0.0
      %548 = vmatprep.subr.mxu0 0.0
      %549 = vmatpush1.msra.mxu0 0.0
      %550 = vmatprep.subr.mxu0 0.0
      %551 = vmatpush1.msra.mxu0 0.0
      %552 = vmatprep.subr.mxu0 0.0
      %553 = vmatpush1.msra.mxu0 0.0
      %554 = vmatprep.subr.mxu0 0.0
      %555 = vmatpush1.msra.mxu0 0.0
      %556 = vmatprep.subr.mxu0 0.0
      %557 = vmatpush1.msra.mxu0 0.0
      %558 = vmatprep.subr.mxu0 0.0
      %559 = vmatpush1.msra.mxu0 0.0
      %560 = vmatprep.subr.mxu0 0.0
      %561 = vmatpush1.msra.mxu0 0.0
      %562 = vmatprep.subr.mxu0 0.0
      %563 = vmatpush1.msra.mxu0 0.0
      %564 = vmatprep.subr.mxu0 0.0
      %565 = vmatpush1.msra.mxu0 0.0
      %566 = vmatprep.subr.mxu0 0.0
      %567 = vmatpush1.msra.mxu0 0.0
      %568 = vmatprep.subr.mxu0 0.0
      %569 = vmatpush1.msra.mxu0 0.0
      %570 = vmatprep.subr.mxu0 0.0
      %571 = vmatpush1.msra.mxu0 0.0
      %572 = vmatprep.subr.mxu0 0.0
      %573 = vmatpush1.msra.mxu0 0.0
      %574 = vmatprep.subr.mxu0 0.0
      %575 = vmatpush1.msra.mxu0 0.0
      %576 = vmatprep.subr.mxu0 0.0
      %577 = vmatpush1.msra.mxu0 0.0
      %578 = vmatprep.subr.mxu0 0.0
      %579 = vmatpush1.msra.mxu0 0.0
      %580 = vmatprep.subr.mxu0 0.0
      %581 = vmatpush1.msra.mxu0 0.0
      %582 = vmatprep.subr.mxu0 0.0
      %583 = vmatpush1.msra.mxu0 0.0
      %584 = vmatprep.subr.mxu0 0.0
      %585 = vmatpush1.msra.mxu0 0.0
      %586 = vmatprep.subr.mxu0 0.0
      %587 = vmatpush1.msra.mxu0 0.0
      %588 = vmatprep.subr.mxu0 0.0
      %589 = vmatpush1.msra.mxu0 0.0
      %590 = vmatprep.subr.mxu0 0.0
      %591 = vmatpush1.msra.mxu0 0.0
      %592 = vmatprep.mubr.f32.mxu0 0.0
      %593 = vmatmul.mubr.f32.gmra.mrb[0].mxu0 %v523
      %v594 = vpop.f32.mrb[0].mxu0
      %v595 = vadd.f32 0.0, %v594
      %v596 = vpop.f32.mrb[0].mxu0
      %597 = vmatprep.mubr.f32.mxu0 0.0
      %598 = vmatmul.mubr.f32.gmra.mrb[0].mxu0 %v526
      %v599 = vpop.f32.mrb[0].mxu0
      %v600 = vadd.f32 0.0, %v599
      %v601 = vpop.f32.mrb[0].mxu0
      %602 = vdwg.mxu0
      %v603 = vadd.f32 %v513, %v595
      %v604 = vadd.f32 %v518, %v600
      %v605 = vld [vmem:[%s4] sm:$0x1]
      %v607 = vlaneseq
      %v608 = vshrl.u32 %v607, 7
      %v609 = vsub.s32 0, %v608
      %v610 = vrot.slane %v605, %v609
      %v612 = vadd.f32 %v603, %v610
      %v613 = vadd.f32 %v604, %v610
      %v614 = vmax.f32 %v612, 0.0
      %v615 = vmax.f32 %v613, 0.0
      %v616 = vld [vmem:[%s5] sm:$0xff]
      %v617 = vld [vmem:[%s5 + $0x8] sm:$0xff]
      %v618 = vld [vmem:[%s6] sm:$0x1]
      %v620 = vlaneseq
      %v621 = vshrl.u32 %v620, 7
      %v622 = vsub.s32 0, %v621
      %v623 = vrot.slane %v618, %v622
      %vm625 = vcmask 130048
      %v627 = vsel %vm625, %v614, 0
      %v630 = vsel %vm625, %v615, 0
      %632 = vmatprep.subr.mxu0 0.0
      %633 = vmatpush1.msra.mxu0 %v616
      %634 = vmatprep.subr.mxu0 0.0
      %635 = vmatpush1.msra.mxu0 %v617
      %636 = vmatprep.subr.mxu0 0.0
      %637 = vmatpush1.msra.mxu0 0.0
      %638 = vmatprep.subr.mxu0 0.0
      %639 = vmatpush1.msra.mxu0 0.0
      %640 = vmatprep.subr.mxu0 0.0
      %641 = vmatpush1.msra.mxu0 0.0
      %642 = vmatprep.subr.mxu0 0.0
      %643 = vmatpush1.msra.mxu0 0.0
      %644 = vmatprep.subr.mxu0 0.0
      %645 = vmatpush1.msra.mxu0 0.0
      %646 = vmatprep.subr.mxu0 0.0
      %647 = vmatpush1.msra.mxu0 0.0
      %648 = vmatprep.subr.mxu0 0.0
      %649 = vmatpush1.msra.mxu0 0.0
      %650 = vmatprep.subr.mxu0 0.0
      %651 = vmatpush1.msra.mxu0 0.0
      %652 = vmatprep.subr.mxu0 0.0
      %653 = vmatpush1.msra.mxu0 0.0
      %654 = vmatprep.subr.mxu0 0.0
      %655 = vmatpush1.msra.mxu0 0.0
      %656 = vmatprep.subr.mxu0 0.0
      %657 = vmatpush1.msra.mxu0 0.0
      %658 = vmatprep.subr.mxu0 0.0
      %659 = vmatpush1.msra.mxu0 0.0
      %660 = vmatprep.subr.mxu0 0.0
      %661 = vmatpush1.msra.mxu0 0.0
      %662 = vmatprep.subr.mxu0 0.0
      %663 = vmatpush1.msra.mxu0 0.0
      %664 = vmatprep.subr.mxu0 0.0
      %665 = vmatpush1.msra.mxu0 0.0
      %666 = vmatprep.subr.mxu0 0.0
      %667 = vmatpush1.msra.mxu0 0.0
      %668 = vmatprep.subr.mxu0 0.0
      %669 = vmatpush1.msra.mxu0 0.0
      %670 = vmatprep.subr.mxu0 0.0
      %671 = vmatpush1.msra.mxu0 0.0
      %672 = vmatprep.subr.mxu0 0.0
      %673 = vmatpush1.msra.mxu0 0.0
      %674 = vmatprep.subr.mxu0 0.0
      %675 = vmatpush1.msra.mxu0 0.0
      %676 = vmatprep.subr.mxu0 0.0
      %677 = vmatpush1.msra.mxu0 0.0
      %678 = vmatprep.subr.mxu0 0.0
      %679 = vmatpush1.msra.mxu0 0.0
      %680 = vmatprep.subr.mxu0 0.0
      %681 = vmatpush1.msra.mxu0 0.0
      %682 = vmatprep.subr.mxu0 0.0
      %683 = vmatpush1.msra.mxu0 0.0
      %684 = vmatprep.subr.mxu0 0.0
      %685 = vmatpush1.msra.mxu0 0.0
      %686 = vmatprep.subr.mxu0 0.0
      %687 = vmatpush1.msra.mxu0 0.0
      %688 = vmatprep.subr.mxu0 0.0
      %689 = vmatpush1.msra.mxu0 0.0
      %690 = vmatprep.subr.mxu0 0.0
      %691 = vmatpush1.msra.mxu0 0.0
      %692 = vmatprep.subr.mxu0 0.0
      %693 = vmatpush1.msra.mxu0 0.0
      %694 = vmatprep.subr.mxu0 0.0
      %695 = vmatpush1.msra.mxu0 0.0
      %696 = vmatprep.mubr.f32.mxu0 0.0
      %697 = vmatmul.mubr.f32.gmra.mrb[0].mxu0 %v627
      %v698 = vpop.f32.mrb[0].mxu0
      %v699 = vadd.f32 %v623, %v698
      %v700 = vpop.f32.mrb[0].mxu0
      %701 = vmatprep.mubr.f32.mxu0 0.0
      %702 = vmatmul.mubr.f32.gmra.mrb[0].mxu0 %v630
      %v703 = vpop.f32.mrb[0].mxu0
      %v704 = vadd.f32 %v623, %v703
      %v705 = vpop.f32.mrb[0].mxu0
      %706 = vdwg.mxu0
      %v707 = vmax.f32 %v699, 0.0
      %v708 = vmax.f32 %v704, 0.0
      %v709 = vld [vmem:[%s7] sm:$0xff]
      %v710 = vld [vmem:[%s8] sm:$0x1]
      %v712 = vlaneseq
      %v713 = vshrl.u32 %v712, 7
      %v714 = vsub.s32 0, %v713
      %v715 = vrot.slane %v710, %v714
      %v718 = vsel %vm358, %v707, 0
      %v721 = vsel %vm358, %v708, 0
      %723 = vmatprep.subr.mxu0 0.0
      %724 = vmatpush1.msra.mxu0 %v709
      %725 = vmatprep.subr.mxu0 0.0
      %726 = vmatpush1.msra.mxu0 0.0
      %727 = vmatprep.subr.mxu0 0.0
      %728 = vmatpush1.msra.mxu0 0.0
      %729 = vmatprep.subr.mxu0 0.0
      %730 = vmatpush1.msra.mxu0 0.0
      %731 = vmatprep.subr.mxu0 0.0
      %732 = vmatpush1.msra.mxu0 0.0
      %733 = vmatprep.subr.mxu0 0.0
      %734 = vmatpush1.msra.mxu0 0.0
      %735 = vmatprep.subr.mxu0 0.0
      %736 = vmatpush1.msra.mxu0 0.0
      %737 = vmatprep.subr.mxu0 0.0
      %738 = vmatpush1.msra.mxu0 0.0
      %739 = vmatprep.subr.mxu0 0.0
      %740 = vmatpush1.msra.mxu0 0.0
      %741 = vmatprep.subr.mxu0 0.0
      %742 = vmatpush1.msra.mxu0 0.0
      %743 = vmatprep.subr.mxu0 0.0
      %744 = vmatpush1.msra.mxu0 0.0
      %745 = vmatprep.subr.mxu0 0.0
      %746 = vmatpush1.msra.mxu0 0.0
      %747 = vmatprep.subr.mxu0 0.0
      %748 = vmatpush1.msra.mxu0 0.0
      %749 = vmatprep.subr.mxu0 0.0
      %750 = vmatpush1.msra.mxu0 0.0
      %751 = vmatprep.subr.mxu0 0.0
      %752 = vmatpush1.msra.mxu0 0.0
      %753 = vmatprep.subr.mxu0 0.0
      %754 = vmatpush1.msra.mxu0 0.0
      %755 = vmatprep.subr.mxu0 0.0
      %756 = vmatpush1.msra.mxu0 0.0
      %757 = vmatprep.subr.mxu0 0.0
      %758 = vmatpush1.msra.mxu0 0.0
      %759 = vmatprep.subr.mxu0 0.0
      %760 = vmatpush1.msra.mxu0 0.0
      %761 = vmatprep.subr.mxu0 0.0
      %762 = vmatpush1.msra.mxu0 0.0
      %763 = vmatprep.subr.mxu0 0.0
      %764 = vmatpush1.msra.mxu0 0.0
      %765 = vmatprep.subr.mxu0 0.0
      %766 = vmatpush1.msra.mxu0 0.0
      %767 = vmatprep.subr.mxu0 0.0
      %768 = vmatpush1.msra.mxu0 0.0
      %769 = vmatprep.subr.mxu0 0.0
      %770 = vmatpush1.msra.mxu0 0.0
      %771 = vmatprep.subr.mxu0 0.0
      %772 = vmatpush1.msra.mxu0 0.0
      %773 = vmatprep.subr.mxu0 0.0
      %774 = vmatpush1.msra.mxu0 0.0
      %775 = vmatprep.subr.mxu0 0.0
      %776 = vmatpush1.msra.mxu0 0.0
      %777 = vmatprep.subr.mxu0 0.0
      %778 = vmatpush1.msra.mxu0 0.0
      %779 = vmatprep.subr.mxu0 0.0
      %780 = vmatpush1.msra.mxu0 0.0
      %781 = vmatprep.subr.mxu0 0.0
      %782 = vmatpush1.msra.mxu0 0.0
      %783 = vmatprep.subr.mxu0 0.0
      %784 = vmatpush1.msra.mxu0 0.0
      %785 = vmatprep.subr.mxu0 0.0
      %786 = vmatpush1.msra.mxu0 0.0
      %787 = vmatprep.mubr.f32.mxu0 0.0
      %788 = vmatmul.mubr.f32.gmra.mrb[0].mxu0 %v718
      %v789 = vpop.f32.mrb[0].mxu0
      %v790 = vadd.f32 %v715, %v789
      %v791 = vpop.f32.mrb[0].mxu0
      %792 = vmatprep.mubr.f32.mxu0 0.0
      %793 = vmatmul.mubr.f32.gmra.mrb[0].mxu0 %v721
      %v794 = vpop.f32.mrb[0].mxu0
      %v795 = vadd.f32 %v715, %v794
      %v796 = vpop.f32.mrb[0].mxu0
      %797 = vdwg.mxu0
      %v798 = vmul.f32 %v790, %v790
      %v799 = vmul.f32 %v795, %v795
      %800 = vadd.xlane.f32.xlu0 %v798
      %v801 = vpop.xlane.xlu0 %800
      %802 = vadd.xlane.f32.xlu0 %v799
      %v803 = vpop.xlane.xlu0 %802
      %v804 = vlaneseq
      %v805 = vand.u32 %v804, 127
      %vm806 = vcmp.eq.s32.totalorder %v805, 8
      %v807 = vsel %vm806, 1, 0
      %v808 = vcvt.s32.f32 %v807
      %vm809 = vcmp.eq.s32.totalorder %v805, 9
      %v810 = vsel %vm809, 1, 0
      %v811 = vcvt.s32.f32 %v810
      %v812 = vmul.f32 %v790, 0.001
      %v813 = vmul.f32 %v795, 0.001
      %v814 = vmul.f32 %v801, -0.0005
      %v815 = vmul.f32 %v803, -0.0005
      %v816 = vmul.f32 %v808, %v814
      %v817 = vmul.f32 %v808, %v815
      %v818 = vadd.f32 %v812, %v816
      %v819 = vadd.f32 %v813, %v817
      %v820 = vmul.f32 %v811, -0.0005
      %v821 = vadd.f32 %v818, %v820
      %v822 = vadd.f32 %v819, %v820
      %823 = vst [vmem:[%s332] sm:$0xff] %v821
      %824 = vst [vmem:[%s332 + $0x8] sm:$0xff] %v822
      %p825 = scmp.lt.s32.totalorder %s20, 1
      %s826 = scalar_select %p825, %s20, 1
      %s827 = smul.addr %s826, 2
      %s828 = smul.addr %s827, 8
      %s829 = scalar_lea.vmem %s9, %s828
      // Predicated region
      $region57: #{alignment_encoder_forward.3} parent=55 // pred_check
        %p830 = pneg %p232
      $region58: #{alignment_encoder_forward.3} parent=55 // pred_check_branch
        %832 = sbr.rel (%p830) target = $region60
      $region59: #{alignment_encoder_forward.3} parent=55 // pred_region
        _
      $region60: #{alignment_encoder_forward.3} parent=55 // pred_fallthru
        _
    $region56: #{alignment_encoder_forward.3} parent=5 // pred_fallthru
      _
    %p833 = scmp.le.s32.totalorder 2, %s15
    // Predicated region
    $region61: #{alignment_encoder_forward.3} parent=5 // pred_check
      %p834 = pneg %p833
    $region62: #{alignment_encoder_forward.3} parent=5 // pred_check_branch
      %836 = sbr.rel (%p834) target = $region64
    $region63: #{alignment_encoder_forward.3} parent=5 // pred_region
      %s837 = ssub.s32 %s15, 2
      // Predicated region
      $region65: #{alignment_encoder_forward.3} parent=63 // pred_check
        %p838 = pneg %p238
      $region66: #{alignment_encoder_forward.3} parent=63 // pred_check_branch
        %840 = sbr.rel (%p838) target = $region68
      $region67: #{alignment_encoder_forward.3} parent=63 // pred_region
        %p841 = scmp.lt.s32.totalorder %s21, 1
        %s842 = scalar_select %p841, %s21, 1
        %s843 = smul.addr %s842, 2
        %s844 = smul.addr %s843, 8
        %s845 = scalar_lea.vmem %s9, %s844
      $region68: #{alignment_encoder_forward.3} parent=63 // pred_fallthru
        _
    $region64: #{alignment_encoder_forward.3} parent=5 // pred_fallthru
      _
  $region6: #{alignment_encoder_forward.3} parent=0 // loop_footer
    %s19 = sadd.s32 1, %s15
  $region7: #{alignment_encoder_forward.3} parent=0 // loop_footer_branch
    %14 = sbr.rel target = $region3
  $region8: #{alignment_encoder_forward.3} parent=0 // loop_exit
    _

// kernel: alignment_encoder_forward.4
$region0: #{alignment_encoder_forward.4}
  #allocation0 [shape = 'u32[]', space=smem, size = 0x4, offset = 0x4, fixed_abs, tag = 'smem constant byte address 0x4 - core index']
  #allocation1 [shape = 'u32[144,128]{1,0:T(1,128)}', space=vmem, size = 0x12000, scoped, tag = 'internal scratch']
  %s0 = inlined_call_operand.vmem [shape: f32[2,16,128], index: 0, kind: input, shape index: {}]
  %s1 = inlined_call_operand.vmem [shape: f32[32,16], index: 1, kind: input, shape index: {}]
  %s2 = inlined_call_operand.vmem [shape: f32[32,16], index: 2, kind: input, shape index: {}]
  %s3 = inlined_call_operand.vmem [shape: f32[32,16], index: 3, kind: input, shape index: {}]
  %s4 = inlined_call_operand.vmem [shape: f32[32,1], index: 4, kind: input, shape index: {}]
  %s5 = inlined_call_operand.vmem [shape: f32[128,32], index: 5, kind: input, shape index: {}]
  %s6 = inlined_call_operand.vmem [shape: f32[128,1], index: 6, kind: input, shape index: {}]
  %s7 = inlined_call_operand.vmem [shape: f32[2,128,128], index: 7, kind: output, shape index: {}]
  %s8 = sld [smem:[#allocation0]]
  $region61: #{alignment_encoder_forward.4} parent=0
    _
  %s10 = ssub.s32 1, %s8
  %s11 = scalar_select 0, %s10, %s8
  loop: start=0, step=1, limit=4
  $region2: #{alignment_encoder_forward.4} parent=0 // loop_pre_header
    _
  $region3: #{alignment_encoder_forward.4} parent=0 // loop_header
    %s13 = sphi 0, %s17
    %p14 = scmp.ge.s32.totalorder %s13, 4
    %s23 = sphi 0, %s25
    %s26 = sphi 0, %s23
    %s27 = sphi 0, %s26
    %s43 = sphi 0, %s27
    %s47 = sphi 0, %s47
    %s49 = sphi 0, %s47
    %s50 = sphi 0, %s49
    %s64 = sphi 0, %s50
    %s68 = sphi 0, %s68
    %s70 = sphi 0, %s68
    %s71 = sphi 0, %s70
    %s85 = sphi 0, %s71
    %s89 = sphi 0, %s89
    %s91 = sphi 0, %s89
    %s92 = sphi 0, %s91
    %s106 = sphi 0, %s92
    %s110 = sphi 0, %s110
    %s112 = sphi 0, %s110
    %s113 = sphi 0, %s112
    %s127 = sphi 0, %s113
    %s131 = sphi 0, %s131
    %s133 = sphi 0, %s131
    %s134 = sphi 0, %s133
    %s148 = sphi 0, %s134
    %s152 = sphi 0, %s152
    %s154 = sphi 0, %s152
    %s155 = sphi 0, %s154
    %s169 = sphi 0, %s155
    %s175 = sphi 0, %s177
    %s178 = sphi 0, %s175
    %s179 = sphi 0, %s178
    %s195 = sphi 0, %s179
  $region4: #{alignment_encoder_forward.4} parent=0 // loop_header_branch
    %16 = sbr.rel (%p14) target = $region8
  $region5: #{alignment_encoder_forward.4} parent=0 // loop_body
    %s18 = ssub.s32 %s13, 1
    %s19 = ssub.s32 %s13, 2
    %s20 = sadd.s32 %s13, 1
    %s21 = ssub.s32 %s13, %s20
    %p22 = scmp.eq.s32.totalorder %s21, 0
    %s24 = sadd.s32 %s23, 1
    %s25 = scalar_select %p22, %s23, %s24
    %p28 = pneg %p22
    %p29 = scmp.eq.s32.totalorder %s13, 1
    %p30 = por %p28, %p29
    %p31 = scmp.ne.s32.totalorder %s23, %s26
    %p32 = scmp.eq.s32.totalorder %s13, 0
    %p33 = por %p31, %p32
    %p34 = scmp.ne.s32.totalorder %s23, %s26
    %p35 = scmp.eq.s32.totalorder %s18, 1
    %p36 = por %p34, %p35
    %p37 = scmp.ne.s32.totalorder %s26, %s27
    %p38 = scmp.eq.s32.totalorder %s18, 0
    %p39 = por %p37, %p38
    %p40 = scmp.ne.s32.totalorder %s26, %s27
    %p41 = scmp.eq.s32.totalorder %s19, 1
    %p42 = por %p40, %p41
    %p44 = scmp.ne.s32.totalorder %s27, %s43
    %p45 = scmp.eq.s32.totalorder %s19, 0
    %p46 = por %p44, %p45
    %s48 = sadd.s32 %s47, 1
    %p51 = scmp.eq.s32.totalorder %s13, 1
    %p52 = scmp.ne.s32.totalorder %s47, %s49
    %p53 = scmp.eq.s32.totalorder %s13, 0
    %p54 = por %p52, %p53
    %p55 = scmp.ne.s32.totalorder %s47, %s49
    %p56 = scmp.eq.s32.totalorder %s18, 1
    %p57 = por %p55, %p56
    %p58 = scmp.ne.s32.totalorder %s49, %s50
    %p59 = scmp.eq.s32.totalorder %s18, 0
    %p60 = por %p58, %p59
    %p61 = scmp.ne.s32.totalorder %s49, %s50
    %p62 = scmp.eq.s32.totalorder %s19, 1
    %p63 = por %p61, %p62
    %p65 = scmp.ne.s32.totalorder %s50, %s64
    %p66 = scmp.eq.s32.totalorder %s19, 0
    %p67 = por %p65, %p66
    %s69 = sadd.s32 %s68, 1
    %p72 = scmp.eq.s32.totalorder %s13, 1
    %p73 = scmp.ne.s32.totalorder %s68, %s70
    %p74 = scmp.eq.s32.totalorder %s13, 0
    %p75 = por %p73, %p74
    %p76 = scmp.ne.s32.totalorder %s68, %s70
    %p77 = scmp.eq.s32.totalorder %s18, 1
    %p78 = por %p76, %p77
    %p79 = scmp.ne.s32.totalorder %s70, %s71
    %p80 = scmp.eq.s32.totalorder %s18, 0
    %p81 = por %p79, %p80
    %p82 = scmp.ne.s32.totalorder %s70, %s71
    %p83 = scmp.eq.s32.totalorder %s19, 1
    %p84 = por %p82, %p83
    %p86 = scmp.ne.s32.totalorder %s71, %s85
    %p87 = scmp.eq.s32.totalorder %s19, 0
    %p88 = por %p86, %p87
    %s90 = sadd.s32 %s89, 1
    %p93 = scmp.eq.s32.totalorder %s13, 1
    %p94 = scmp.ne.s32.totalorder %s89, %s91
    %p95 = scmp.eq.s32.totalorder %s13, 0
    %p96 = por %p94, %p95
    %p97 = scmp.ne.s32.totalorder %s89, %s91
    %p98 = scmp.eq.s32.totalorder %s18, 1
    %p99 = por %p97, %p98
    %p100 = scmp.ne.s32.totalorder %s91, %s92
    %p101 = scmp.eq.s32.totalorder %s18, 0
    %p102 = por %p100, %p101
    %p103 = scmp.ne.s32.totalorder %s91, %s92
    %p104 = scmp.eq.s32.totalorder %s19, 1
    %p105 = por %p103, %p104
    %p107 = scmp.ne.s32.totalorder %s92, %s106
    %p108 = scmp.eq.s32.totalorder %s19, 0
    %p109 = por %p107, %p108
    %s111 = sadd.s32 %s110, 1
    %p114 = scmp.eq.s32.totalorder %s13, 1
    %p115 = scmp.ne.s32.totalorder %s110, %s112
    %p116 = scmp.eq.s32.totalorder %s13, 0
    %p117 = por %p115, %p116
    %p118 = scmp.ne.s32.totalorder %s110, %s112
    %p119 = scmp.eq.s32.totalorder %s18, 1
    %p120 = por %p118, %p119
    %p121 = scmp.ne.s32.totalorder %s112, %s113
    %p122 = scmp.eq.s32.totalorder %s18, 0
    %p123 = por %p121, %p122
    %p124 = scmp.ne.s32.totalorder %s112, %s113
    %p125 = scmp.eq.s32.totalorder %s19, 1
    %p126 = por %p124, %p125
    %p128 = scmp.ne.s32.totalorder %s113, %s127
    %p129 = scmp.eq.s32.totalorder %s19, 0
    %p130 = por %p128, %p129
    %s132 = sadd.s32 %s131, 1
    %p135 = scmp.eq.s32.totalorder %s13, 1
    %p136 = scmp.ne.s32.totalorder %s131, %s133
    %p137 = scmp.eq.s32.totalorder %s13, 0
    %p138 = por %p136, %p137
    %p139 = scmp.ne.s32.totalorder %s131, %s133
    %p140 = scmp.eq.s32.totalorder %s18, 1
    %p141 = por %p139, %p140
    %p142 = scmp.ne.s32.totalorder %s133, %s134
    %p143 = scmp.eq.s32.totalorder %s18, 0
    %p144 = por %p142, %p143
    %p145 = scmp.ne.s32.totalorder %s133, %s134
    %p146 = scmp.eq.s32.totalorder %s19, 1
    %p147 = por %p145, %p146
    %p149 = scmp.ne.s32.totalorder %s134, %s148
    %p150 = scmp.eq.s32.totalorder %s19, 0
    %p151 = por %p149, %p150
    %s153 = sadd.s32 %s152, 1
    %p156 = scmp.eq.s32.totalorder %s13, 1
    %p157 = scmp.ne.s32.totalorder %s152, %s154
    %p158 = scmp.eq.s32.totalorder %s13, 0
    %p159 = por %p157, %p158
    %p160 = scmp.ne.s32.totalorder %s152, %s154
    %p161 = scmp.eq.s32.totalorder %s18, 1
    %p162 = por %p160, %p161
    %p163 = scmp.ne.s32.totalorder %s154, %s155
    %p164 = scmp.eq.s32.totalorder %s18, 0
    %p165 = por %p163, %p164
    %p166 = scmp.ne.s32.totalorder %s154, %s155
    %p167 = scmp.eq.s32.totalorder %s19, 1
    %p168 = por %p166, %p167
    %p170 = scmp.ne.s32.totalorder %s155, %s169
    %p171 = scmp.eq.s32.totalorder %s19, 0
    %p172 = por %p170, %p171
    %s173 = ssub.s32 %s13, %s20
    %p174 = scmp.eq.s32.totalorder %s173, 0
    %s176 = sadd.s32 %s175, 1
    %s177 = scalar_select %p174, %s175, %s176
    %p180 = pneg %p174
    %p181 = scmp.eq.s32.totalorder %s13, 1
    %p182 = por %p180, %p181
    %p183 = scmp.ne.s32.totalorder %s175, %s178
    %p184 = scmp.eq.s32.totalorder %s13, 0
    %p185 = por %p183, %p184
    %p186 = scmp.ne.s32.totalorder %s175, %s178
    %p187 = scmp.eq.s32.totalorder %s18, 1
    %p188 = por %p186, %p187
    %p189 = scmp.ne.s32.totalorder %s178, %s179
    %p190 = scmp.eq.s32.totalorder %s18, 0
    %p191 = por %p189, %p190
    %p192 = scmp.ne.s32.totalorder %s178, %s179
    %p193 = scmp.eq.s32.totalorder %s19, 1
    %p194 = por %p192, %p193
    %p196 = scmp.ne.s32.totalorder %s179, %s195
    %p197 = scmp.eq.s32.totalorder %s19, 0
    %p198 = por %p196, %p197
    %p199 = scmp.le.s32.totalorder 1, %s13
    %p200 = scmp.lt.s32.totalorder %s13, 3
    %p201 = pnand %p199, %p200
    %p202 = pneg %p201
    // Predicated region
    $region9: #{alignment_encoder_forward.4} parent=5 // pred_check
      _
    $region10: #{alignment_encoder_forward.4} parent=5 // pred_check_branch
      %204 = sbr.rel (%p201) target = $region12
    $region11: #{alignment_encoder_forward.4} parent=5 // pred_region
      %s205 = ssub.s32 %s13, 1
      // Predicated region
      $region13: #{alignment_encoder_forward.4} parent=11 // pred_check
        %p206 = pneg %p60
      $region14: #{alignment_encoder_forward.4} parent=11 // pred_check_branch
        %208 = sbr.rel (%p206) target = $region16
      $region15: #{alignment_encoder_forward.4} parent=11 // pred_region
        _
      $region16: #{alignment_encoder_forward.4} parent=11 // pred_fallthru
        _
      // Predicated region
      $region17: #{alignment_encoder_forward.4} parent=11 // pred_check
        %p209 = pneg %p81
      $region18: #{alignment_encoder_forward.4} parent=11 // pred_check_branch
        %211 = sbr.rel (%p209) target = $region20
      $region19: #{alignment_encoder_forward.4} parent=11 // pred_region
        _
      $region20: #{alignment_encoder_forward.4} parent=11 // pred_fallthru
        _
      // Predicated region
      $region21: #{alignment_encoder_forward.4} parent=11 // pred_check
        %p212 = pneg %p102
      $region22: #{alignment_encoder_forward.4} parent=11 // pred_check_branch
        %214 = sbr.rel (%p212) target = $region24
      $region23: #{alignment_encoder_forward.4} parent=11 // pred_region
        _
      $region24: #{alignment_encoder_forward.4} parent=11 // pred_fallthru
        _
      // Predicated region
      $region25: #{alignment_encoder_forward.4} parent=11 // pred_check
        %p215 = pneg %p123
      $region26: #{alignment_encoder_forward.4} parent=11 // pred_check_branch
        %217 = sbr.rel (%p215) target = $region28
      $region27: #{alignment_encoder_forward.4} parent=11 // pred_region
        _
      $region28: #{alignment_encoder_forward.4} parent=11 // pred_fallthru
        _
      // Predicated region
      $region29: #{alignment_encoder_forward.4} parent=11 // pred_check
        %p218 = pneg %p144
      $region30: #{alignment_encoder_forward.4} parent=11 // pred_check_branch
        %220 = sbr.rel (%p218) target = $region32
      $region31: #{alignment_encoder_forward.4} parent=11 // pred_region
        _
      $region32: #{alignment_encoder_forward.4} parent=11 // pred_fallthru
        _
      // Predicated region
      $region33: #{alignment_encoder_forward.4} parent=11 // pred_check
        %p221 = pneg %p165
      $region34: #{alignment_encoder_forward.4} parent=11 // pred_check_branch
        %223 = sbr.rel (%p221) target = $region36
      $region35: #{alignment_encoder_forward.4} parent=11 // pred_region
        _
      $region36: #{alignment_encoder_forward.4} parent=11 // pred_fallthru
        _
    $region12: #{alignment_encoder_forward.4} parent=5 // pred_fallthru
      _
    %p224 = scmp.lt.s32.totalorder %s13, 2
    // Predicated region
    $region37: #{alignment_encoder_forward.4} parent=5 // pred_check
      %p225 = pneg %p224
    $region38: #{alignment_encoder_forward.4} parent=5 // pred_check_branch
      %227 = sbr.rel (%p225) target = $region40
    $region39: #{alignment_encoder_forward.4} parent=5 // pred_region
      // Predicated region
      $region41: #{alignment_encoder_forward.4} parent=39 // pred_check
        %p228 = pneg %p33
      $region42: #{alignment_encoder_forward.4} parent=39 // pred_check_branch
        %230 = sbr.rel (%p228) target = $region44
      $region43: #{alignment_encoder_forward.4} parent=39 // pred_region
        %p231 = scmp.lt.s32.totalorder %s13, 1
        %s232 = scalar_select %p231, %s13, 1
        %s233 = smul.addr %s232, 2
        %s234 = smul.addr %s233, 8
        %s235 = scalar_lea.vmem %s0, %s234
      $region44: #{alignment_encoder_forward.4} parent=39 // pred_fallthru
        _
    $region40: #{alignment_encoder_forward.4} parent=5 // pred_fallthru
      _
    %p236 = scmp.le.s32.totalorder 1, %s13
    %p237 = scmp.lt.s32.totalorder %s13, 3
    %p238 = pnand %p236, %p237
    %p239 = pneg %p238
    // Predicated region
    $region45: #{alignment_encoder_forward.4} parent=5 // pred_check
      _
    $region46: #{alignment_encoder_forward.4} parent=5 // pred_check_branch
      %241 = sbr.rel (%p238) target = $region48
    $region47: #{alignment_encoder_forward.4} parent=5 // pred_region
      %s242 = ssub.s32 %s13, 1
      %p243 = scmp.lt.s32.totalorder %s18, 1
      %s244 = scalar_select %p243, %s18, 1
      %s245 = smul.addr %s244, 2
      %s246 = smul.addr %s245, 8
      %s247 = scalar_lea.vmem %s0, %s246
      %p248 = pneg %p39
      %p249 = pneg %p36
      %p250 = pneg %p60
      %p251 = pneg %p57
      %p252 = pneg %p81
      %p253 = pneg %p78
      %p254 = pneg %p102
      %p255 = pneg %p99
      %p256 = pneg %p123
      %p257 = pneg %p120
      %p258 = pneg %p144
      %p259 = pneg %p141
      %p260 = pneg %p165
      %p261 = pneg %p162
      %p262 = pneg %p191
      %p263 = pneg %p188
      %p264 = scmp.lt.s32.totalorder %s18, 1
      %s265 = scalar_select %p264, %s18, 1
      %s266 = smul.addr %s265, 16
      %s267 = smul.addr %s266, 8
      %s268 = scalar_lea.vmem %s7, %s267
      %p269 = scmp.lt.s32.totalorder %s18, 1
      %s270 = scalar_select %p269, %s18, 1
      %s271 = smul.addr %s270, 2
      %s272 = smul.addr %s271, 8
      %s273 = scalar_lea.vmem %s0, %s272
      %p274 = scmp.lt.s32.totalorder %s18, 1
      %s275 = scalar_select %p274, %s18, 1
      %s276 = smul.addr %s275, 16
      %s277 = smul.addr %s276, 8
      %s278 = scalar_lea.vmem %s7, %s277
      %v279 = vld [vmem:[%s273] sm:$0xff]
      %v280 = vld [vmem:[%s273 + $0x8] sm:$0xff]
      %v281 = vlaneseq
      %v282 = vand.u32 %v281, 127
      %vm283 = vcmp.eq.s32.totalorder %v282, 0
      %284 = vrot.lane.b32.xlu0 %v279, 1
      %v285 = vpop.permute.xlu0 %284
      %286 = vrot.lane.b32.xlu0 %v280, 1
      %v287 = vpop.permute.xlu0 %286
      %v288 = vsel %vm283, 0.0, %v285
      %v289 = vsel %vm283, 0.0, %v287
      %vm290 = vcmp.eq.s32.totalorder %v282, 127
      %291 = vrot.lane.b32.xlu0 %v279, 127
      %v292 = vpop.permute.xlu0 %291
      %293 = vrot.lane.b32.xlu0 %v280, 127
      %v294 = vpop.permute.xlu0 %293
      %v295 = vsel %vm290, 0.0, %v292
      %v296 = vsel %vm290, 0.0, %v294
      %v297 = vld [vmem:[%s1] sm:$0xff]
      %v298 = vld [vmem:[%s1 + $0x8] sm:$0xff]
      %v299 = vld [vmem:[%s1 + $0x10] sm:$0xff]
      %v300 = vld [vmem:[%s1 + $0x18] sm:$0xff]
      %v301 = vld [vmem:[%s2] sm:$0xff]
      %v302 = vld [vmem:[%s2 + $0x8] sm:$0xff]
      %v303 = vld [vmem:[%s2 + $0x10] sm:$0xff]
      %v304 = vld [vmem:[%s2 + $0x18] sm:$0xff]
      %vm305 = vcmask 130048
      %v307 = vsel %vm305, %v301, 0
      %v310 = vsel %vm305, %v302, 0
      %v313 = vsel %vm305, %v303, 0
      %v316 = vsel %vm305, %v304, 0
      %318 = vmatprep.subr.mxu0 0.0
      %319 = vmatpush1.msra.mxu0 %v279
      %320 = vmatprep.subr.mxu0 0.0
      %321 = vmatpush1.msra.mxu0 %v280
      %322 = vmatprep.subr.mxu0 0.0
      %323 = vmatpush1.msra.mxu0 0.0
      %324 = vmatprep.subr.mxu0 0.0
      %325 = vmatpush1.msra.mxu0 0.0
      %326 = vmatprep.subr.mxu0 0.0
      %327 = vmatpush1.msra.mxu0 0.0
      %328 = vmatprep.subr.mxu0 0.0
      %329 = vmatpush1.msra.mxu0 0.0
      %330 = vmatprep.subr.mxu0 0.0
      %331 = vmatpush1.msra.mxu0 0.0
      %332 = vmatprep.subr.mxu0 0.0
      %333 = vmatpush1.msra.mxu0 0.0
      %334 = vmatprep.subr.mxu0 0.0
      %335 = vmatpush1.msra.mxu0 0.0
      %336 = vmatprep.subr.mxu0 0.0
      %337 = vmatpush1.msra.mxu0 0.0
      %338 = vmatprep.subr.mxu0 0.0
      %339 = vmatpush1.msra.mxu0 0.0
      %340 = vmatprep.subr.mxu0 0.0
      %341 = vmatpush1.msra.mxu0 0.0
      %342 = vmatprep.subr.mxu0 0.0
      %343 = vmatpush1.msra.mxu0 0.0
      %344 = vmatprep.subr.mxu0 0.0
      %345 = vmatpush1.msra.mxu0 0.0
      %346 = vmatprep.subr.mxu0 0.0
      %347 = vmatpush1.msra.mxu0 0.0
      %348 = vmatprep.subr.mxu0 0.0
      %349 = vmatpush1.msra.mxu0 0.0
      %350 = vmatprep.subr.mxu0 0.0
      %351 = vmatpush1.msra.mxu0 0.0
      %352 = vmatprep.subr.mxu0 0.0
      %353 = vmatpush1.msra.mxu0 0.0
      %354 = vmatprep.subr.mxu0 0.0
      %355 = vmatpush1.msra.mxu0 0.0
      %356 = vmatprep.subr.mxu0 0.0
      %357 = vmatpush1.msra.mxu0 0.0
      %358 = vmatprep.subr.mxu0 0.0
      %359 = vmatpush1.msra.mxu0 0.0
      %360 = vmatprep.subr.mxu0 0.0
      %361 = vmatpush1.msra.mxu0 0.0
      %362 = vmatprep.subr.mxu0 0.0
      %363 = vmatpush1.msra.mxu0 0.0
      %364 = vmatprep.subr.mxu0 0.0
      %365 = vmatpush1.msra.mxu0 0.0
      %366 = vmatprep.subr.mxu0 0.0
      %367 = vmatpush1.msra.mxu0 0.0
      %368 = vmatprep.subr.mxu0 0.0
      %369 = vmatpush1.msra.mxu0 0.0
      %370 = vmatprep.subr.mxu0 0.0
      %371 = vmatpush1.msra.mxu0 0.0
      %372 = vmatprep.subr.mxu0 0.0
      %373 = vmatpush1.msra.mxu0 0.0
      %374 = vmatprep.subr.mxu0 0.0
      %375 = vmatpush1.msra.mxu0 0.0
      %376 = vmatprep.subr.mxu0 0.0
      %377 = vmatpush1.msra.mxu0 0.0
      %378 = vmatprep.subr.mxu0 0.0
      %379 = vmatpush1.msra.mxu0 0.0
      %380 = vmatprep.subr.mxu0 0.0
      %381 = vmatpush1.msra.mxu0 0.0
      %382 = vmatprep.mubr.f32.mxu0 0.0
      %383 = vmatmul.mubr.f32.gmra.mrb[0].mxu0 %v307
      %v384 = vpop.f32.mrb[0].mxu0
      %v385 = vadd.f32 0.0, %v384
      %v386 = vpop.f32.mrb[0].mxu0
      %387 = vmatprep.mubr.f32.mxu0 0.0
      %388 = vmatmul.mubr.f32.gmra.mrb[0].mxu0 %v310
      %v389 = vpop.f32.mrb[0].mxu0
      %v390 = vadd.f32 0.0, %v389
      %v391 = vpop.f32.mrb[0].mxu0
      %392 = vmatprep.mubr.f32.mxu0 0.0
      %393 = vmatmul.mubr.f32.gmra.mrb[0].mxu0 %v313
      %v394 = vpop.f32.mrb[0].mxu0
      %v395 = vadd.f32 0.0, %v394
      %v396 = vpop.f32.mrb[0].mxu0
      %397 = vmatprep.mubr.f32.mxu0 0.0
      %398 = vmatmul.mubr.f32.gmra.mrb[0].mxu0 %v316
      %v399 = vpop.f32.mrb[0].mxu0
      %v400 = vadd.f32 0.0, %v399
      %v401 = vpop.f32.mrb[0].mxu0
      %402 = vdwg.mxu0
      %v404 = vsel %vm305, %v297, 0
      %v407 = vsel %vm305, %v298, 0
      %v410 = vsel %vm305, %v299, 0
      %v413 = vsel %vm305, %v300, 0
      %415 = vmatprep.subr.mxu0 0.0
      %416 = vmatpush1.msra.mxu0 %v288
      %417 = vmatprep.subr.mxu0 0.0
      %418 = vmatpush1.msra.mxu0 %v289
      %419 = vmatprep.subr.mxu0 0.0
      %420 = vmatpush1.msra.mxu0 0.0
      %421 = vmatprep.subr.mxu0 0.0
      %422 = vmatpush1.msra.mxu0 0.0
      %423 = vmatprep.subr.mxu0 0.0
      %424 = vmatpush1.msra.mxu0 0.0
      %425 = vmatprep.subr.mxu0 0.0
      %426 = vmatpush1.msra.mxu0 0.0
      %427 = vmatprep.subr.mxu0 0.0
      %428 = vmatpush1.msra.mxu0 0.0
      %429 = vmatprep.subr.mxu0 0.0
      %430 = vmatpush1.msra.mxu0 0.0
      %431 = vmatprep.subr.mxu0 0.0
      %432 = vmatpush1.msra.mxu0 0.0
      %433 = vmatprep.subr.mxu0 0.0
      %434 = vmatpush1.msra.mxu0 0.0
      %435 = vmatprep.subr.mxu0 0.0
      %436 = vmatpush1.msra.mxu0 0.0
      %437 = vmatprep.subr.mxu0 0.0
      %438 = vmatpush1.msra.mxu0 0.0
      %439 = vmatprep.subr.mxu0 0.0
      %440 = vmatpush1.msra.mxu0 0.0
      %441 = vmatprep.subr.mxu0 0.0
      %442 = vmatpush1.msra.mxu0 0.0
      %443 = vmatprep.subr.mxu0 0.0
      %444 = vmatpush1.msra.mxu0 0.0
      %445 = vmatprep.subr.mxu0 0.0
      %446 = vmatpush1.msra.mxu0 0.0
      %447 = vmatprep.subr.mxu0 0.0
      %448 = vmatpush1.msra.mxu0 0.0
      %449 = vmatprep.subr.mxu0 0.0
      %450 = vmatpush1.msra.mxu0 0.0
      %451 = vmatprep.subr.mxu0 0.0
      %452 = vmatpush1.msra.mxu0 0.0
      %453 = vmatprep.subr.mxu0 0.0
      %454 = vmatpush1.msra.mxu0 0.0
      %455 = vmatprep.subr.mxu0 0.0
      %456 = vmatpush1.msra.mxu0 0.0
      %457 = vmatprep.subr.mxu0 0.0
      %458 = vmatpush1.msra.mxu0 0.0
      %459 = vmatprep.subr.mxu0 0.0
      %460 = vmatpush1.msra.mxu0 0.0
      %461 = vmatprep.subr.mxu0 0.0
      %462 = vmatpush1.msra.mxu0 0.0
      %463 = vmatprep.subr.mxu0 0.0
      %464 = vmatpush1.msra.mxu0 0.0
      %465 = vmatprep.subr.mxu0 0.0
      %466 = vmatpush1.msra.mxu0 0.0
      %467 = vmatprep.subr.mxu0 0.0
      %468 = vmatpush1.msra.mxu0 0.0
      %469 = vmatprep.subr.mxu0 0.0
      %470 = vmatpush1.msra.mxu0 0.0
      %471 = vmatprep.subr.mxu0 0.0
      %472 = vmatpush1.msra.mxu0 0.0
      %473 = vmatprep.subr.mxu0 0.0
      %474 = vmatpush1.msra.mxu0 0.0
      %475 = vmatprep.subr.mxu0 0.0
      %476 = vmatpush1.msra.mxu0 0.0
      %477 = vmatprep.subr.mxu0 0.0
      %478 = vmatpush1.msra.mxu0 0.0
      %479 = vmatprep.mubr.f32.mxu0 0.0
      %480 = vmatmul.mubr.f32.gmra.mrb[0].mxu0 %v404
      %v481 = vpop.f32.mrb[0].mxu0
      %v482 = vadd.f32 %v385, %v481
      %v483 = vpop.f32.mrb[0].mxu0
      %484 = vmatprep.mubr.f32.mxu0 0.0
      %485 = vmatmul.mubr.f32.gmra.mrb[0].mxu0 %v407
      %v486 = vpop.f32.mrb[0].mxu0
      %v487 = vadd.f32 %v390, %v486
      %v488 = vpop.f32.mrb[0].mxu0
      %489 = vmatprep.mubr.f32.mxu0 0.0
      %490 = vmatmul.mubr.f32.gmra.mrb[0].mxu0 %v410
      %v491 = vpop.f32.mrb[0].mxu0
      %v492 = vadd.f32 %v395, %v491
      %v493 = vpop.f32.mrb[0].mxu0
      %494 = vmatprep.mubr.f32.mxu0 0.0
      %495 = vmatmul.mubr.f32.gmra.mrb[0].mxu0 %v413
      %v496 = vpop.f32.mrb[0].mxu0
      %v497 = vadd.f32 %v400, %v496
      %v498 = vpop.f32.mrb[0].mxu0
      %499 = vdwg.mxu0
      %v500 = vld [vmem:[%s3] sm:$0xff]
      %v501 = vld [vmem:[%s3 + $0x8] sm:$0xff]
      %v502 = vld [vmem:[%s3 + $0x10] sm:$0xff]
      %v503 = vld [vmem:[%s3 + $0x18] sm:$0xff]
      %v505 = vsel %vm305, %v500, 0
      %v508 = vsel %vm305, %v501, 0
      %v511 = vsel %vm305, %v502, 0
      %v514 = vsel %vm305, %v503, 0
      %516 = vmatprep.subr.mxu0 0.0
      %517 = vmatpush1.msra.mxu0 %v295
      %518 = vmatprep.subr.mxu0 0.0
      %519 = vmatpush1.msra.mxu0 %v296
      %520 = vmatprep.subr.mxu0 0.0
      %521 = vmatpush1.msra.mxu0 0.0
      %522 = vmatprep.subr.mxu0 0.0
      %523 = vmatpush1.msra.mxu0 0.0
      %524 = vmatprep.subr.mxu0 0.0
      %525 = vmatpush1.msra.mxu0 0.0
      %526 = vmatprep.subr.mxu0 0.0
      %527 = vmatpush1.msra.mxu0 0.0
      %528 = vmatprep.subr.mxu0 0.0
      %529 = vmatpush1.msra.mxu0 0.0
      %530 = vmatprep.subr.mxu0 0.0
      %531 = vmatpush1.msra.mxu0 0.0
      %532 = vmatprep.subr.mxu0 0.0
      %533 = vmatpush1.msra.mxu0 0.0
      %534 = vmatprep.subr.mxu0 0.0
      %535 = vmatpush1.msra.mxu0 0.0
      %536 = vmatprep.subr.mxu0 0.0
      %537 = vmatpush1.msra.mxu0 0.0
      %538 = vmatprep.subr.mxu0 0.0
      %539 = vmatpush1.msra.mxu0 0.0
      %540 = vmatprep.subr.mxu0 0.0
      %541 = vmatpush1.msra.mxu0 0.0
      %542 = vmatprep.subr.mxu0 0.0
      %543 = vmatpush1.msra.mxu0 0.0
      %544 = vmatprep.subr.mxu0 0.0
      %545 = vmatpush1.msra.mxu0 0.0
      %546 = vmatprep.subr.mxu0 0.0
      %547 = vmatpush1.msra.mxu0 0.0
      %548 = vmatprep.subr.mxu0 0.0
      %549 = vmatpush1.msra.mxu0 0.0
      %550 = vmatprep.subr.mxu0 0.0
      %551 = vmatpush1.msra.mxu0 0.0
      %552 = vmatprep.subr.mxu0 0.0
      %553 = vmatpush1.msra.mxu0 0.0
      %554 = vmatprep.subr.mxu0 0.0
      %555 = vmatpush1.msra.mxu0 0.0
      %556 = vmatprep.subr.mxu0 0.0
      %557 = vmatpush1.msra.mxu0 0.0
      %558 = vmatprep.subr.mxu0 0.0
      %559 = vmatpush1.msra.mxu0 0.0
      %560 = vmatprep.subr.mxu0 0.0
      %561 = vmatpush1.msra.mxu0 0.0
      %562 = vmatprep.subr.mxu0 0.0
      %563 = vmatpush1.msra.mxu0 0.0
      %564 = vmatprep.subr.mxu0 0.0
      %565 = vmatpush1.msra.mxu0 0.0
      %566 = vmatprep.subr.mxu0 0.0
      %567 = vmatpush1.msra.mxu0 0.0
      %568 = vmatprep.subr.mxu0 0.0
      %569 = vmatpush1.msra.mxu0 0.0
      %570 = vmatprep.subr.mxu0 0.0
      %571 = vmatpush1.msra.mxu0 0.0
      %572 = vmatprep.subr.mxu0 0.0
      %573 = vmatpush1.msra.mxu0 0.0
      %574 = vmatprep.subr.mxu0 0.0
      %575 = vmatpush1.msra.mxu0 0.0
      %576 = vmatprep.subr.mxu0 0.0
      %577 = vmatpush1.msra.mxu0 0.0
      %578 = vmatprep.subr.mxu0 0.0
      %579 = vmatpush1.msra.mxu0 0.0
      %580 = vmatprep.mubr.f32.mxu0 0.0
      %581 = vmatmul.mubr.f32.gmra.mrb[0].mxu0 %v505
      %v582 = vpop.f32.mrb[0].mxu0
      %v583 = vadd.f32 0.0, %v582
      %v584 = vpop.f32.mrb[0].mxu0
      %585 = vmatprep.mubr.f32.mxu0 0.0
      %586 = vmatmul.mubr.f32.gmra.mrb[0].mxu0 %v508
      %v587 = vpop.f32.mrb[0].mxu0
      %v588 = vadd.f32 0.0, %v587
      %v589 = vpop.f32.mrb[0].mxu0
      %590 = vmatprep.mubr.f32.mxu0 0.0
      %591 = vmatmul.mubr.f32.gmra.mrb[0].mxu0 %v511
      %v592 = vpop.f32.mrb[0].mxu0
      %v593 = vadd.f32 0.0, %v592
      %v594 = vpop.f32.mrb[0].mxu0
      %595 = vmatprep.mubr.f32.mxu0 0.0
      %596 = vmatmul.mubr.f32.gmra.mrb[0].mxu0 %v514
      %v597 = vpop.f32.mrb[0].mxu0
      %v598 = vadd.f32 0.0, %v597
      %v599 = vpop.f32.mrb[0].mxu0
      %600 = vdwg.mxu0
      %v601 = vadd.f32 %v482, %v583
      %v602 = vadd.f32 %v487, %v588
      %v603 = vadd.f32 %v492, %v593
      %v604 = vadd.f32 %v497, %v598
      %v605 = vld [vmem:[%s4] sm:$0xff]
      %v606 = vld [vmem:[%s4 + $0x8] sm:$0xff]
      %v607 = vld [vmem:[%s4 + $0x10] sm:$0xff]
      %v608 = vld [vmem:[%s4 + $0x18] sm:$0xff]
      %610 = vset.pattern.permute.xlu0 0
      %611 = vperm.xlu0 %610, %v605
      %v612 = vpop.permute.xlu0 %611
      %615 = vset.pattern.permute.xlu0 0
      %616 = vperm.xlu0 %615, %v606
      %v617 = vpop.permute.xlu0 %616
      %620 = vset.pattern.permute.xlu0 0
      %621 = vperm.xlu0 %620, %v607
      %v622 = vpop.permute.xlu0 %621
      %625 = vset.pattern.permute.xlu0 0
      %626 = vperm.xlu0 %625, %v608
      %v627 = vpop.permute.xlu0 %626
      %v629 = vadd.f32 %v601, %v612
      %v630 = vadd.f32 %v602, %v617
      %v631 = vadd.f32 %v603, %v622
      %v632 = vadd.f32 %v604, %v627
      %v633 = vmax.f32 %v629, 0.0
      %v634 = vmax.f32 %v630, 0.0
      %v635 = vmax.f32 %v631, 0.0
      %v636 = vmax.f32 %v632, 0.0
      %v637 = vld [vmem:[%s5] sm:$0xff]
      %v638 = vld [vmem:[%s5 + $0x8] sm:$0xff]
      %v639 = vld [vmem:[%s5 + $0x10] sm:$0xff]
      %v640 = vld [vmem:[%s5 + $0x18] sm:$0xff]
      %v641 = vld [vmem:[%s5 + $0x20] sm:$0xff]
      %v642 = vld [vmem:[%s5 + $0x28] sm:$0xff]
      %v643 = vld [vmem:[%s5 + $0x30] sm:$0xff]
      %v644 = vld [vmem:[%s5 + $0x38] sm:$0xff]
      %v645 = vld [vmem:[%s5 + $0x40] sm:$0xff]
      %v646 = vld [vmem:[%s5 + $0x48] sm:$0xff]
      %v647 = vld [vmem:[%s5 + $0x50] sm:$0xff]
      %v648 = vld [vmem:[%s5 + $0x58] sm:$0xff]
      %v649 = vld [vmem:[%s5 + $0x60] sm:$0xff]
      %v650 = vld [vmem:[%s5 + $0x68] sm:$0xff]
      %v651 = vld [vmem:[%s5 + $0x70] sm:$0xff]
      %v652 = vld [vmem:[%s5 + $0x78] sm:$0xff]
      %v653 = vld [vmem:[%s6] sm:$0xff]
      %v654 = vld [vmem:[%s6 + $0x8] sm:$0xff]
      %v655 = vld [vmem:[%s6 + $0x10] sm:$0xff]
      %v656 = vld [vmem:[%s6 + $0x18] sm:$0xff]
      %v657 = vld [vmem:[%s6 + $0x20] sm:$0xff]
      %v658 = vld [vmem:[%s6 + $0x28] sm:$0xff]
      %v659 = vld [vmem:[%s6 + $0x30] sm:$0xff]
      %v660 = vld [vmem:[%s6 + $0x38] sm:$0xff]
      %v661 = vld [vmem:[%s6 + $0x40] sm:$0xff]
      %v662 = vld [vmem:[%s6 + $0x48] sm:$0xff]
      %v663 = vld [vmem:[%s6 + $0x50] sm:$0xff]
      %v664 = vld [vmem:[%s6 + $0x58] sm:$0xff]
      %v665 = vld [vmem:[%s6 + $0x60] sm:$0xff]
      %v666 = vld [vmem:[%s6 + $0x68] sm:$0xff]
      %v667 = vld [vmem:[%s6 + $0x70] sm:$0xff]
      %v668 = vld [vmem:[%s6 + $0x78] sm:$0xff]
      %670 = vset.pattern.permute.xlu0 0
      %671 = vperm.xlu0 %670, %v653
      %v672 = vpop.permute.xlu0 %671
      %675 = vset.pattern.permute.xlu0 0
      %676 = vperm.xlu0 %675, %v654
      %v677 = vpop.permute.xlu0 %676
      %680 = vset.pattern.permute.xlu0 0
      %681 = vperm.xlu0 %680, %v655
      %v682 = vpop.permute.xlu0 %681
      %685 = vset.pattern.permute.xlu0 0
      %686 = vperm.xlu0 %685, %v656
      %v687 = vpop.permute.xlu0 %686
      %690 = vset.pattern.permute.xlu0 0
      %691 = vperm.xlu0 %690, %v657
      %v692 = vpop.permute.xlu0 %691
      %695 = vset.pattern.permute.xlu0 0
      %696 = vperm.xlu0 %695, %v658
      %v697 = vpop.permute.xlu0 %696
      %700 = vset.pattern.permute.xlu0 0
      %701 = vperm.xlu0 %700, %v659
      %v702 = vpop.permute.xlu0 %701
      %705 = vset.pattern.permute.xlu0 0
      %706 = vperm.xlu0 %705, %v660
      %v707 = vpop.permute.xlu0 %706
      %710 = vset.pattern.permute.xlu0 0
      %711 = vperm.xlu0 %710, %v661
      %v712 = vpop.permute.xlu0 %711
      %715 = vset.pattern.permute.xlu0 0
      %716 = vperm.xlu0 %715, %v662
      %v717 = vpop.permute.xlu0 %716
      %720 = vset.pattern.permute.xlu0 0
      %721 = vperm.xlu0 %720, %v663
      %v722 = vpop.permute.xlu0 %721
      %725 = vset.pattern.permute.xlu0 0
      %726 = vperm.xlu0 %725, %v664
      %v727 = vpop.permute.xlu0 %726
      %730 = vset.pattern.permute.xlu0 0
      %731 = vperm.xlu0 %730, %v665
      %v732 = vpop.permute.xlu0 %731
      %735 = vset.pattern.permute.xlu0 0
      %736 = vperm.xlu0 %735, %v666
      %v737 = vpop.permute.xlu0 %736
      %740 = vset.pattern.permute.xlu0 0
      %741 = vperm.xlu0 %740, %v667
      %v742 = vpop.permute.xlu0 %741
      %745 = vset.pattern.permute.xlu0 0
      %746 = vperm.xlu0 %745, %v668
      %v747 = vpop.permute.xlu0 %746
      %vm749 = vcmask 261120
      %v751 = vsel %vm749, %v637, 0
      %v754 = vsel %vm749, %v638, 0
      %v757 = vsel %vm749, %v639, 0
      %v760 = vsel %vm749, %v640, 0
      %v763 = vsel %vm749, %v641, 0
      %v766 = vsel %vm749, %v642, 0
      %v769 = vsel %vm749, %v643, 0
      %v772 = vsel %vm749, %v644, 0
      %v775 = vsel %vm749, %v645, 0
      %v778 = vsel %vm749, %v646, 0
      %v781 = vsel %vm749, %v647, 0
      %v784 = vsel %vm749, %v648, 0
      %v787 = vsel %vm749, %v649, 0
      %v790 = vsel %vm749, %v650, 0
      %v793 = vsel %vm749, %v651, 0
      %v796 = vsel %vm749, %v652, 0
      %798 = vmatprep.subr.mxu0 0.0
      %799 = vmatpush1.msra.mxu0 %v633
      %800 = vmatprep.subr.mxu0 0.0
      %801 = vmatpush1.msra.mxu0 %v634
      %802 = vmatprep.subr.mxu0 0.0
      %803 = vmatpush1.msra.mxu0 %v635
      %804 = vmatprep.subr.mxu0 0.0
      %805 = vmatpush1.msra.mxu0 %v636
      %806 = vmatprep.subr.mxu0 0.0
      %807 = vmatpush1.msra.mxu0 0.0
      %808 = vmatprep.subr.mxu0 0.0
      %809 = vmatpush1.msra.mxu0 0.0
      %810 = vmatprep.subr.mxu0 0.0
      %811 = vmatpush1.msra.mxu0 0.0
      %812 = vmatprep.subr.mxu0 0.0
      %813 = vmatpush1.msra.mxu0 0.0
      %814 = vmatprep.subr.mxu0 0.0
      %815 = vmatpush1.msra.mxu0 0.0
      %816 = vmatprep.subr.mxu0 0.0
      %817 = vmatpush1.msra.mxu0 0.0
      %818 = vmatprep.subr.mxu0 0.0
      %819 = vmatpush1.msra.mxu0 0.0
      %820 = vmatprep.subr.mxu0 0.0
      %821 = vmatpush1.msra.mxu0 0.0
      %822 = vmatprep.subr.mxu0 0.0
      %823 = vmatpush1.msra.mxu0 0.0
      %824 = vmatprep.subr.mxu0 0.0
      %825 = vmatpush1.msra.mxu0 0.0
      %826 = vmatprep.subr.mxu0 0.0
      %827 = vmatpush1.msra.mxu0 0.0
      %828 = vmatprep.subr.mxu0 0.0
      %829 = vmatpush1.msra.mxu0 0.0
      %830 = vmatprep.subr.mxu0 0.0
      %831 = vmatpush1.msra.mxu0 0.0
      %832 = vmatprep.subr.mxu0 0.0
      %833 = vmatpush1.msra.mxu0 0.0
      %834 = vmatprep.subr.mxu0 0.0
      %835 = vmatpush1.msra.mxu0 0.0
      %836 = vmatprep.subr.mxu0 0.0
      %837 = vmatpush1.msra.mxu0 0.0
      %838 = vmatprep.subr.mxu0 0.0
      %839 = vmatpush1.msra.mxu0 0.0
      %840 = vmatprep.subr.mxu0 0.0
      %841 = vmatpush1.msra.mxu0 0.0
      %842 = vmatprep.subr.mxu0 0.0
      %843 = vmatpush1.msra.mxu0 0.0
      %844 = vmatprep.subr.mxu0 0.0
      %845 = vmatpush1.msra.mxu0 0.0
      %846 = vmatprep.subr.mxu0 0.0
      %847 = vmatpush1.msra.mxu0 0.0
      %848 = vmatprep.subr.mxu0 0.0
      %849 = vmatpush1.msra.mxu0 0.0
      %850 = vmatprep.subr.mxu0 0.0
      %851 = vmatpush1.msra.mxu0 0.0
      %852 = vmatprep.subr.mxu0 0.0
      %853 = vmatpush1.msra.mxu0 0.0
      %854 = vmatprep.subr.mxu0 0.0
      %855 = vmatpush1.msra.mxu0 0.0
      %856 = vmatprep.subr.mxu0 0.0
      %857 = vmatpush1.msra.mxu0 0.0
      %858 = vmatprep.subr.mxu0 0.0
      %859 = vmatpush1.msra.mxu0 0.0
      %860 = vmatprep.subr.mxu0 0.0
      %861 = vmatpush1.msra.mxu0 0.0
      %862 = vmatprep.mubr.f32.mxu0 0.0
      %863 = vmatmul.mubr.f32.gmra.mrb[0].mxu0 %v751
      %v864 = vpop.f32.mrb[0].mxu0
      %v865 = vadd.f32 %v672, %v864
      %v866 = vpop.f32.mrb[0].mxu0
      %867 = vmatprep.mubr.f32.mxu0 0.0
      %868 = vmatmul.mubr.f32.gmra.mrb[0].mxu0 %v754
      %v869 = vpop.f32.mrb[0].mxu0
      %v870 = vadd.f32 %v677, %v869
      %v871 = vpop.f32.mrb[0].mxu0
      %872 = vmatprep.mubr.f32.mxu0 0.0
      %873 = vmatmul.mubr.f32.gmra.mrb[0].mxu0 %v757
      %v874 = vpop.f32.mrb[0].mxu0
      %v875 = vadd.f32 %v682, %v874
      %v876 = vpop.f32.mrb[0].mxu0
      %877 = vmatprep.mubr.f32.mxu0 0.0
      %878 = vmatmul.mubr.f32.gmra.mrb[0].mxu0 %v760
      %v879 = vpop.f32.mrb[0].mxu0
      %v880 = vadd.f32 %v687, %v879
      %v881 = vpop.f32.mrb[0].mxu0
      %882 = vmatprep.mubr.f32.mxu0 0.0
      %883 = vmatmul.mubr.f32.gmra.mrb[0].mxu0 %v763
      %v884 = vpop.f32.mrb[0].mxu0
      %v885 = vadd.f32 %v692, %v884
      %v886 = vpop.f32.mrb[0].mxu0
      %887 = vmatprep.mubr.f32.mxu0 0.0
      %888 = vmatmul.mubr.f32.gmra.mrb[0].mxu0 %v766
      %v889 = vpop.f32.mrb[0].mxu0
      %v890 = vadd.f32 %v697, %v889
      %v891 = vpop.f32.mrb[0].mxu0
      %892 = vmatprep.mubr.f32.mxu0 0.0
      %893 = vmatmul.mubr.f32.gmra.mrb[0].mxu0 %v769
      %v894 = vpop.f32.mrb[0].mxu0
      %v895 = vadd.f32 %v702, %v894
      %v896 = vpop.f32.mrb[0].mxu0
      %897 = vmatprep.mubr.f32.mxu0 0.0
      %898 = vmatmul.mubr.f32.gmra.mrb[0].mxu0 %v772
      %v899 = vpop.f32.mrb[0].mxu0
      %v900 = vadd.f32 %v707, %v899
      %v901 = vpop.f32.mrb[0].mxu0
      %902 = vmatprep.mubr.f32.mxu0 0.0
      %903 = vmatmul.mubr.f32.gmra.mrb[0].mxu0 %v775
      %v904 = vpop.f32.mrb[0].mxu0
      %v905 = vadd.f32 %v712, %v904
      %v906 = vpop.f32.mrb[0].mxu0
      %907 = vmatprep.mubr.f32.mxu0 0.0
      %908 = vmatmul.mubr.f32.gmra.mrb[0].mxu0 %v778
      %v909 = vpop.f32.mrb[0].mxu0
      %v910 = vadd.f32 %v717, %v909
      %v911 = vpop.f32.mrb[0].mxu0
      %912 = vmatprep.mubr.f32.mxu0 0.0
      %913 = vmatmul.mubr.f32.gmra.mrb[0].mxu0 %v781
      %v914 = vpop.f32.mrb[0].mxu0
      %v915 = vadd.f32 %v722, %v914
      %v916 = vpop.f32.mrb[0].mxu0
      %917 = vmatprep.mubr.f32.mxu0 0.0
      %918 = vmatmul.mubr.f32.gmra.mrb[0].mxu0 %v784
      %v919 = vpop.f32.mrb[0].mxu0
      %v920 = vadd.f32 %v727, %v919
      %v921 = vpop.f32.mrb[0].mxu0
      %922 = vmatprep.mubr.f32.mxu0 0.0
      %923 = vmatmul.mubr.f32.gmra.mrb[0].mxu0 %v787
      %v924 = vpop.f32.mrb[0].mxu0
      %v925 = vadd.f32 %v732, %v924
      %v926 = vpop.f32.mrb[0].mxu0
      %927 = vmatprep.mubr.f32.mxu0 0.0
      %928 = vmatmul.mubr.f32.gmra.mrb[0].mxu0 %v790
      %v929 = vpop.f32.mrb[0].mxu0
      %v930 = vadd.f32 %v737, %v929
      %v931 = vpop.f32.mrb[0].mxu0
      %932 = vmatprep.mubr.f32.mxu0 0.0
      %933 = vmatmul.mubr.f32.gmra.mrb[0].mxu0 %v793
      %v934 = vpop.f32.mrb[0].mxu0
      %v935 = vadd.f32 %v742, %v934
      %v936 = vpop.f32.mrb[0].mxu0
      %937 = vmatprep.mubr.f32.mxu0 0.0
      %938 = vmatmul.mubr.f32.gmra.mrb[0].mxu0 %v796
      %v939 = vpop.f32.mrb[0].mxu0
      %v940 = vadd.f32 %v747, %v939
      %v941 = vpop.f32.mrb[0].mxu0
      %942 = vdwg.mxu0
      %v943 = vmul.f32 %v865, %v865
      %v944 = vmul.f32 %v870, %v870
      %v945 = vmul.f32 %v875, %v875
      %v946 = vmul.f32 %v880, %v880
      %v947 = vmul.f32 %v885, %v885
      %v948 = vmul.f32 %v890, %v890
      %v949 = vmul.f32 %v895, %v895
      %v950 = vmul.f32 %v900, %v900
      %v951 = vmul.f32 %v905, %v905
      %v952 = vmul.f32 %v910, %v910
      %v953 = vmul.f32 %v915, %v915
      %v954 = vmul.f32 %v920, %v920
      %v955 = vmul.f32 %v925, %v925
      %v956 = vmul.f32 %v930, %v930
      %v957 = vmul.f32 %v935, %v935
      %v958 = vmul.f32 %v940, %v940
      %v959 = vadd.f32 %v943, %v944
      %v960 = vadd.f32 %v959, %v945
      %v961 = vadd.f32 %v960, %v946
      %v962 = vadd.f32 %v961, %v947
      %v963 = vadd.f32 %v962, %v948
      %v964 = vadd.f32 %v963, %v949
      %v965 = vadd.f32 %v964, %v950
      %v966 = vadd.f32 %v965, %v951
      %v967 = vadd.f32 %v966, %v952
      %v968 = vadd.f32 %v967, %v953
      %v969 = vadd.f32 %v968, %v954
      %v970 = vadd.f32 %v969, %v955
      %v971 = vadd.f32 %v970, %v956
      %v972 = vadd.f32 %v971, %v957
      %v973 = vadd.f32 %v972, %v958
      %v974 = vrot.slane %v973, 4
      %v975 = vadd.f32 %v973, %v974
      %v976 = vrot.slane %v975, 2
      %v977 = vadd.f32 %v975, %v976
      %v978 = vrot.slane %v977, 1
      %v979 = vadd.f32 %v977, %v978
      %vm980 = vcmp.lt.s32.totalorder %v282, 8
      %v981 = vsel %vm980, %v979, 1e+30
      %v982 = vlaneseq
      %v983 = vshrl.u32 %v982, 7
      %v984 = vadd.s32 %v983, 8
      %v985 = vadd.s32 %v983, 16
      %v986 = vadd.s32 %v983, 24
      %v987 = vadd.s32 %v983, 32
      %v988 = vadd.s32 %v983, 40
      %v989 = vadd.s32 %v983, 48
      %v990 = vadd.s32 %v983, 56
      %v991 = vadd.s32 %v983, 64
      %v992 = vadd.s32 %v983, 72
      %v993 = vadd.s32 %v983, 80
      %v994 = vadd.s32 %v983, 88
      %v995 = vadd.s32 %v983, 96
      %v996 = vadd.s32 %v983, 104
      %v997 = vadd.s32 %v983, 112
      %v998 = vadd.s32 %v983, 120
      %vm999 = vcmp.eq.s32.totalorder %v983, 8
      %vm1000 = vcmp.eq.s32.totalorder %v984, 8
      %vm1001 = vcmp.eq.s32.totalorder %v985, 8
      %vm1002 = vcmp.eq.s32.totalorder %v986, 8
      %vm1003 = vcmp.eq.s32.totalorder %v987, 8
      %vm1004 = vcmp.eq.s32.totalorder %v988, 8
      %vm1005 = vcmp.eq.s32.totalorder %v989, 8
      %vm1006 = vcmp.eq.s32.totalorder %v990, 8
      %vm1007 = vcmp.eq.s32.totalorder %v991, 8
      %vm1008 = vcmp.eq.s32.totalorder %v992, 8
      %vm1009 = vcmp.eq.s32.totalorder %v993, 8
      %vm1010 = vcmp.eq.s32.totalorder %v994, 8
      %vm1011 = vcmp.eq.s32.totalorder %v995, 8
      %vm1012 = vcmp.eq.s32.totalorder %v996, 8
      %vm1013 = vcmp.eq.s32.totalorder %v997, 8
      %vm1014 = vcmp.eq.s32.totalorder %v998, 8
      %v1015 = vsel %vm999, 1, 0
      %v1016 = vsel %vm1000, 1, 0
      %v1017 = vsel %vm1001, 1, 0
      %v1018 = vsel %vm1002, 1, 0
      %v1019 = vsel %vm1003, 1, 0
      %v1020 = vsel %vm1004, 1, 0
      %v1021 = vsel %vm1005, 1, 0
      %v1022 = vsel %vm1006, 1, 0
      %v1023 = vsel %vm1007, 1, 0
      %v1024 = vsel %vm1008, 1, 0
      %v1025 = vsel %vm1009, 1, 0
      %v1026 = vsel %vm1010, 1, 0
      %v1027 = vsel %vm1011, 1, 0
      %v1028 = vsel %vm1012, 1, 0
      %v1029 = vsel %vm1013, 1, 0
      %v1030 = vsel %vm1014, 1, 0
      %v1031 = vcvt.s32.f32 %v1015
      %v1032 = vcvt.s32.f32 %v1016
      %v1033 = vcvt.s32.f32 %v1017
      %v1034 = vcvt.s32.f32 %v1018
      %v1035 = vcvt.s32.f32 %v1019
      %v1036 = vcvt.s32.f32 %v1020
      %v1037 = vcvt.s32.f32 %v1021
      %v1038 = vcvt.s32.f32 %v1022
      %v1039 = vcvt.s32.f32 %v1023
      %v1040 = vcvt.s32.f32 %v1024
      %v1041 = vcvt.s32.f32 %v1025
      %v1042 = vcvt.s32.f32 %v1026
      %v1043 = vcvt.s32.f32 %v1027
      %v1044 = vcvt.s32.f32 %v1028
      %v1045 = vcvt.s32.f32 %v1029
      %v1046 = vcvt.s32.f32 %v1030
      %vm1047 = vcmp.eq.s32.totalorder %v983, 9
      %vm1048 = vcmp.eq.s32.totalorder %v984, 9
      %vm1049 = vcmp.eq.s32.totalorder %v985, 9
      %vm1050 = vcmp.eq.s32.totalorder %v986, 9
      %vm1051 = vcmp.eq.s32.totalorder %v987, 9
      %vm1052 = vcmp.eq.s32.totalorder %v988, 9
      %vm1053 = vcmp.eq.s32.totalorder %v989, 9
      %vm1054 = vcmp.eq.s32.totalorder %v990, 9
      %vm1055 = vcmp.eq.s32.totalorder %v991, 9
      %vm1056 = vcmp.eq.s32.totalorder %v992, 9
      %vm1057 = vcmp.eq.s32.totalorder %v993, 9
      %vm1058 = vcmp.eq.s32.totalorder %v994, 9
      %vm1059 = vcmp.eq.s32.totalorder %v995, 9
      %vm1060 = vcmp.eq.s32.totalorder %v996, 9
      %vm1061 = vcmp.eq.s32.totalorder %v997, 9
      %vm1062 = vcmp.eq.s32.totalorder %v998, 9
      %v1063 = vsel %vm1047, 1, 0
      %v1064 = vsel %vm1048, 1, 0
      %v1065 = vsel %vm1049, 1, 0
      %v1066 = vsel %vm1050, 1, 0
      %v1067 = vsel %vm1051, 1, 0
      %v1068 = vsel %vm1052, 1, 0
      %v1069 = vsel %vm1053, 1, 0
      %v1070 = vsel %vm1054, 1, 0
      %v1071 = vsel %vm1055, 1, 0
      %v1072 = vsel %vm1056, 1, 0
      %v1073 = vsel %vm1057, 1, 0
      %v1074 = vsel %vm1058, 1, 0
      %v1075 = vsel %vm1059, 1, 0
      %v1076 = vsel %vm1060, 1, 0
      %v1077 = vsel %vm1061, 1, 0
      %v1078 = vsel %vm1062, 1, 0
      %v1079 = vcvt.s32.f32 %v1063
      %v1080 = vcvt.s32.f32 %v1064
      %v1081 = vcvt.s32.f32 %v1065
      %v1082 = vcvt.s32.f32 %v1066
      %v1083 = vcvt.s32.f32 %v1067
      %v1084 = vcvt.s32.f32 %v1068
      %v1085 = vcvt.s32.f32 %v1069
      %v1086 = vcvt.s32.f32 %v1070
      %v1087 = vcvt.s32.f32 %v1071
      %v1088 = vcvt.s32.f32 %v1072
      %v1089 = vcvt.s32.f32 %v1073
      %v1090 = vcvt.s32.f32 %v1074
      %v1091 = vcvt.s32.f32 %v1075
      %v1092 = vcvt.s32.f32 %v1076
      %v1093 = vcvt.s32.f32 %v1077
      %v1094 = vcvt.s32.f32 %v1078
      %v1095 = vadd.f32 %v865, %v1031
      %v1096 = vadd.f32 %v870, %v1032
      %v1097 = vadd.f32 %v875, %v1033
      %v1098 = vadd.f32 %v880, %v1034
      %v1099 = vadd.f32 %v885, %v1035
      %v1100 = vadd.f32 %v890, %v1036
      %v1101 = vadd.f32 %v895, %v1037
      %v1102 = vadd.f32 %v900, %v1038
      %v1103 = vadd.f32 %v905, %v1039
      %v1104 = vadd.f32 %v910, %v1040
      %v1105 = vadd.f32 %v915, %v1041
      %v1106 = vadd.f32 %v920, %v1042
      %v1107 = vadd.f32 %v925, %v1043
      %v1108 = vadd.f32 %v930, %v1044
      %v1109 = vadd.f32 %v935, %v1045
      %v1110 = vadd.f32 %v940, %v1046
      %v1111 = vmul.f32 %v1079, %v981
      %v1112 = vmul.f32 %v1080, %v981
      %v1113 = vmul.f32 %v1081, %v981
      %v1114 = vmul.f32 %v1082, %v981
      %v1115 = vmul.f32 %v1083, %v981
      %v1116 = vmul.f32 %v1084, %v981
      %v1117 = vmul.f32 %v1085, %v981
      %v1118 = vmul.f32 %v1086, %v981
      %v1119 = vmul.f32 %v1087, %v981
      %v1120 = vmul.f32 %v1088, %v981
      %v1121 = vmul.f32 %v1089, %v981
      %v1122 = vmul.f32 %v1090, %v981
      %v1123 = vmul.f32 %v1091, %v981
      %v1124 = vmul.f32 %v1092, %v981
      %v1125 = vmul.f32 %v1093, %v981
      %v1126 = vmul.f32 %v1094, %v981
      %v1127 = vadd.f32 %v1095, %v1111
      %v1128 = vadd.f32 %v1096, %v1112
      %v1129 = vadd.f32 %v1097, %v1113
      %v1130 = vadd.f32 %v1098, %v1114
      %v1131 = vadd.f32 %v1099, %v1115
      %v1132 = vadd.f32 %v1100, %v1116
      %v1133 = vadd.f32 %v1101, %v1117
      %v1134 = vadd.f32 %v1102, %v1118
      %v1135 = vadd.f32 %v1103, %v1119
      %v1136 = vadd.f32 %v1104, %v1120
      %v1137 = vadd.f32 %v1105, %v1121
      %v1138 = vadd.f32 %v1106, %v1122
      %v1139 = vadd.f32 %v1107, %v1123
      %v1140 = vadd.f32 %v1108, %v1124
      %v1141 = vadd.f32 %v1109, %v1125
      %v1142 = vadd.f32 %v1110, %v1126
      %1143 = vst [vmem:[%s278] sm:$0xff] %v1127
      %1144 = vst [vmem:[%s278 + $0x8] sm:$0xff] %v1128
      %1145 = vst [vmem:[%s278 + $0x10] sm:$0xff] %v1129
      %1146 = vst [vmem:[%s278 + $0x18] sm:$0xff] %v1130
      %1147 = vst [vmem:[%s278 + $0x20] sm:$0xff] %v1131
      %1148 = vst [vmem:[%s278 + $0x28] sm:$0xff] %v1132
      %1149 = vst [vmem:[%s278 + $0x30] sm:$0xff] %v1133
      %1150 = vst [vmem:[%s278 + $0x38] sm:$0xff] %v1134
      %1151 = vst [vmem:[%s278 + $0x40] sm:$0xff] %v1135
      %1152 = vst [vmem:[%s278 + $0x48] sm:$0xff] %v1136
      %1153 = vst [vmem:[%s278 + $0x50] sm:$0xff] %v1137
      %1154 = vst [vmem:[%s278 + $0x58] sm:$0xff] %v1138
      %1155 = vst [vmem:[%s278 + $0x60] sm:$0xff] %v1139
      %1156 = vst [vmem:[%s278 + $0x68] sm:$0xff] %v1140
      %1157 = vst [vmem:[%s278 + $0x70] sm:$0xff] %v1141
      %1158 = vst [vmem:[%s278 + $0x78] sm:$0xff] %v1142
      %p1159 = scmp.lt.s32.totalorder %s18, 1
      %s1160 = scalar_select %p1159, %s18, 1
      %s1161 = smul.addr %s1160, 16
      %s1162 = smul.addr %s1161, 8
      %s1163 = scalar_lea.vmem %s7, %s1162
      // Predicated region
      $region49: #{alignment_encoder_forward.4} parent=47 // pred_check
        %p1164 = pneg %p188
      $region50: #{alignment_encoder_forward.4} parent=47 // pred_check_branch
        %1166 = sbr.rel (%p1164) target = $region52
      $region51: #{alignment_encoder_forward.4} parent=47 // pred_region
        _
      $region52: #{alignment_encoder_forward.4} parent=47 // pred_fallthru
        _
    $region48: #{alignment_encoder_forward.4} parent=5 // pred_fallthru
      _
    %p1167 = scmp.le.s32.totalorder 2, %s13
    // Predicated region
    $region53: #{alignment_encoder_forward.4} parent=5 // pred_check
      %p1168 = pneg %p1167
    $region54: #{alignment_encoder_forward.4} parent=5 // pred_check_branch
      %1170 = sbr.rel (%p1168) target = $region56
    $region55: #{alignment_encoder_forward.4} parent=5 // pred_region
      %s1171 = ssub.s32 %s13, 2
      // Predicated region
      $region57: #{alignment_encoder_forward.4} parent=55 // pred_check
        %p1172 = pneg %p194
      $region58: #{alignment_encoder_forward.4} parent=55 // pred_check_branch
        %1174 = sbr.rel (%p1172) target = $region60
      $region59: #{alignment_encoder_forward.4} parent=55 // pred_region
        %p1175 = scmp.lt.s32.totalorder %s19, 1
        %s1176 = scalar_select %p1175, %s19, 1
        %s1177 = smul.addr %s1176, 16
        %s1178 = smul.addr %s1177, 8
        %s1179 = scalar_lea.vmem %s7, %s1178
      $region60: #{alignment_encoder_forward.4} parent=55 // pred_fallthru
        _
    $region56: #{alignment_encoder_forward.4} parent=5 // pred_fallthru
      _
  $region6: #{alignment_encoder_forward.4} parent=0 // loop_footer
    %s17 = sadd.s32 1, %s13
  $region7: #{alignment_encoder_forward.4} parent=0 // loop_footer_branch
    %12 = sbr.rel target = $region3
  $region8: #{alignment_encoder_forward.4} parent=0 // loop_exit
    _

</llo_original>
